<compile_context>
chip_gen: v6e
topology: v6e:2x2x1
jax: 0.10.0
libtpu: 0.0.40
codegen_flags: <defaults>
</compile_context>

<pallas_src>
import functools

import jax
import jax.numpy as jnp
from jax.experimental import pallas as pl
from jax.experimental.pallas import tpu as pltpu

K = 5        # kernel size
PAD = 2      # padding
KK = K * K
LANE = 128   # TPU lane width


def _basic_block_kernel(x_ref, mask_ref, w1_ref, w2_ref, aff_ref, out_ref,
                        cols_ref, *, B, HWp, shifts):
    """One batch group: fused conv5x5+BN+ReLU -> conv5x5+BN -> +x -> ReLU."""
    cin = x_ref.shape[1]
    cols_dt = cols_ref.dtype
    aff = aff_ref[...]                              # (planes, 4) f32

    # Residual / layer-1 activation: one (Cin, HWp) f32 slab per image.
    xs = [x_ref[b] for b in range(B)]

    def build_cols(acts, c):
        # Fills the shared im2col scratch (KK*c, B*HWp): row t*c + ch holds
        # channel ch of image b (lane segment b) shifted by tap t, zeroed
        # outside the image (this implements the 2-pixel zero padding).
        # Rolls and the mask multiply stay f32 (v5e-friendly); the single cast
        # to the bf16 scratch dtype happens at the store.
        for t, shift in enumerate(shifts):
            m = mask_ref[pl.ds(t, 1), :]            # (1, HWp) 0/1, hoisted per tap
            for b in range(B):
                a = acts[b]                         # (c, HWp) f32
                shifted = a if shift == 0 else pltpu.roll(a, shift, axis=1)
                cols_ref[pl.ds(t * c, c), pl.ds(b * HWp, HWp)] = (
                    (shifted * m).astype(cols_dt))

    # ---- layer 1: conv5x5 -> BN -> ReLU (activation never leaves VMEM) ----
    build_cols(xs, cin)
    acc1 = jax.lax.dot_general(
        w1_ref[...], cols_ref[...], (((1,), (0,)), ((), ())),
        preferred_element_type=jnp.float32)         # (planes, B*HWp) f32
    a1 = jnp.maximum(acc1 * aff[:, 0:1] + aff[:, 1:2], 0.0)

    # ---- layer 2: conv5x5 -> BN -> + residual -> ReLU ----
    cout = a1.shape[0]
    build_cols([a1[:, b * HWp:(b + 1) * HWp] for b in range(B)], cout)
    acc2 = jax.lax.dot_general(
        w2_ref[...], cols_ref[...], (((1,), (0,)), ((), ())),
        preferred_element_type=jnp.float32)         # (planes, B*HWp) f32
    y = acc2 * aff[:, 2:3] + aff[:, 3:4]
    for b in range(B):
        out_ref[b] = jnp.maximum(
            y[:, b * HWp:(b + 1) * HWp] + xs[b], 0.0).astype(out_ref.dtype)


def _pick_batch_tile(N, planes, HWp, elem, max_tile=8, scratch_budget=8 << 20):
    """Largest divisor of N (<= max_tile) that keeps >= 2 grid steps and a
    bounded im2col scratch."""
    best = 1
    for b in range(2, min(N, max_tile) + 1):
        if N % b == 0 and N // b >= 2 and KK * planes * b * HWp * elem <= scratch_budget:
            best = b
    return best


def basic_block_5x5(x_nchw, params):
    """Full BasicBlock5x5 forward. Input/output in PyTorch NCHW layout."""
    N, cin, H, W = x_nchw.shape
    w1_hwio = params["w1"]                          # (K, K, Cin, planes)
    w2_hwio = params["w2"]                          # (K, K, planes, planes)
    planes = w1_hwio.shape[-1]
    if cin != planes:
        raise NotImplementedError(
            "identity residual requires inplanes == planes (downsample=None)")

    HW = H * W
    HWp = ((HW + LANE - 1) // LANE) * LANE          # lane-dense spatial axis

    # bf16 scratch needs even channel counts so every tap-row offset is
    # aligned to the sublane packing; otherwise fall back to f32.
    op_dtype = jnp.bfloat16 if planes % 2 == 0 else jnp.float32
    elem = 2 if op_dtype == jnp.bfloat16 else 4

    B = _pick_batch_tile(N, planes, HWp, elem)
    G = N // B

    # Flatten conv weights to (Cout, KK*Cin); row order matches the im2col
    # matrix (row = (kh*K + kw)*Cin + c).
    w1_flat = w1_hwio.reshape(KK * cin, planes).T.astype(op_dtype)
    w2_flat = w2_hwio.reshape(KK * planes, planes).T.astype(op_dtype)
    # Folded BN affine params: columns = [scale1, shift1, scale2, shift2].
    aff = jnp.stack([params["scale1"], params["shift1"],
                     params["scale2"], params["shift2"]], axis=1)   # (planes, 4)

    # Precomputed tap-validity masks (hoisted out of the kernel) and the
    # static lane-roll amount per tap.
    lane = jnp.arange(HWp, dtype=jnp.int32)
    hh, ww = lane // W, lane % W
    in_img = lane < HW
    rows, shifts = [], []
    for kh in range(K):
        for kw in range(K):
            dh, dw = kh - PAD, kw - PAD
            rows.append((hh + dh >= 0) & (hh + dh < H) &
                        (ww + dw >= 0) & (ww + dw < W) & in_img)
            shifts.append((-(dh * W + dw)) % HWp)
    mask = jnp.stack(rows).astype(jnp.float32)      # (KK, HWp)

    x_flat = x_nchw.reshape(N, cin, HW)             # stays NCHW, free reshape
    if HWp != HW:
        x_flat = jnp.pad(x_flat, ((0, 0), (0, 0), (0, HWp - HW)))

    kernel = functools.partial(_basic_block_kernel, B=B, HWp=HWp,
                               shifts=tuple(shifts))

    flops = 2 * N * HW * KK * (cin * planes + planes * planes)
    bytes_accessed = ((x_flat.size + N * planes * HWp) * 4
                      + (w1_flat.size + w2_flat.size) * elem
                      + (aff.size + mask.size) * 4)

    # Explicit VMEM budget: double-buffered IO blocks + shared cols scratch
    # + resident constants, with 2x headroom (clamped to [8 MiB, 64 MiB]).
    scratch_bytes = KK * planes * B * HWp * elem
    io_bytes = 2 * (B * cin * HWp * 4 + B * planes * HWp * 4)
    const_bytes = (w1_flat.size + w2_flat.size) * elem + (aff.size + mask.size) * 4
    vmem_limit = int(min(max(2 * (scratch_bytes + 2 * io_bytes + const_bytes),
                             8 << 20), 64 << 20))

    out = pl.pallas_call(
        kernel,
        out_shape=jax.ShapeDtypeStruct((N, planes, HWp), x_nchw.dtype),
        grid_spec=pltpu.PrefetchScalarGridSpec(
            num_scalar_prefetch=0,
            grid=(G,),
            in_specs=[
                pl.BlockSpec((B, cin, HWp), lambda g: (g, 0, 0)),
                pl.BlockSpec((KK, HWp), lambda g: (0, 0)),          # masks
                pl.BlockSpec((planes, KK * cin), lambda g: (0, 0)),
                pl.BlockSpec((planes, KK * planes), lambda g: (0, 0)),
                pl.BlockSpec((planes, 4), lambda g: (0, 0)),
            ],
            out_specs=pl.BlockSpec((B, planes, HWp), lambda g: (g, 0, 0)),
            scratch_shapes=[
                pltpu.VMEM((KK * planes, B * HWp), op_dtype),  # shared im2col
            ],
        ),
        compiler_params=pltpu.CompilerParams(
            dimension_semantics=("parallel",),       # batch groups across TCs
            vmem_limit_bytes=vmem_limit),
        cost_estimate=pl.CostEstimate(
            flops=flops, transcendentals=0, bytes_accessed=bytes_accessed),
    )(x_flat, mask, w1_flat, w2_flat, aff)

    return out[:, :, :HW].reshape(N, planes, H, W)


def make_params(key, inplanes, planes):
    """Deterministic synthetic parameters (conv weights/bias + folded BN)."""
    ks = jax.random.split(key, 12)
    eps = 1e-5

    def bn_fold(gk, bk, mk, vk, conv_bias, c):
        gamma = 1.0 + 0.1 * jax.random.normal(gk, (c,), jnp.float32)
        beta = 0.1 * jax.random.normal(bk, (c,), jnp.float32)
        mean = 0.1 * jax.random.normal(mk, (c,), jnp.float32)
        var = jnp.abs(jax.random.normal(vk, (c,), jnp.float32)) + 0.5
        scale = gamma / jnp.sqrt(var + eps)
        shift = beta + (conv_bias - mean) * scale
        return scale, shift

    w1 = 0.1 * jax.random.normal(ks[0], (K, K, inplanes, planes), jnp.float32)
    b1 = 0.1 * jax.random.normal(ks[1], (planes,), jnp.float32)
    w2 = 0.1 * jax.random.normal(ks[2], (K, K, planes, planes), jnp.float32)
    b2 = 0.1 * jax.random.normal(ks[3], (planes,), jnp.float32)

    scale1, shift1 = bn_fold(ks[4], ks[5], ks[6], ks[7], b1, planes)
    scale2, shift2 = bn_fold(ks[8], ks[9], ks[10], ks[11], b2, planes)

    return dict(w1=w1, scale1=scale1, shift1=shift1,
                w2=w2, scale2=scale2, shift2=shift2)


def _reference_block(x_nchw, params):
    """Plain-JAX reference (bf16 matmul operands, f32 accumulate / BN /
    residual / ReLU — same precision path as the kernel)."""
    x = jnp.transpose(x_nchw, (0, 2, 3, 1))          # NHWC, f32 residual path

    def conv(v, w):
        return jax.lax.conv_general_dilated(
            v.astype(jnp.bfloat16), w.astype(jnp.bfloat16),
            window_strides=(1, 1), padding=((PAD, PAD), (PAD, PAD)),
            dimension_numbers=("NHWC", "HWIO", "NHWC"),
            preferred_element_type=jnp.float32)

    o = conv(x, params["w1"]) * params["scale1"] + params["shift1"]
    o = jnp.maximum(o, 0.0)
    o = conv(o, params["w2"]) * params["scale2"] + params["shift2"]
    o = jnp.maximum(o + x, 0.0)
    return jnp.transpose(o, (0, 3, 1, 2))


if __name__ == "__main__":
    key = jax.random.PRNGKey(0)
    # Case 1: batch=2, 16x16 (lane-aligned H*W, batch tile B=1, grid=(2,)).
    # Case 2: batch=4, 12x12 (H*W padded 144->256, batch tile B=2, grid=(2,)).
    for (N, C, Hh, Ww) in [(2, 4, 16, 16), (4, 4, 12, 12)]:
        kx, kp, key = jax.random.split(key, 3)
        x = jax.random.normal(kx, (N, C, Hh, Ww), jnp.float32)
        params = make_params(kp, C, C)

        out = jax.block_until_ready(basic_block_5x5(x, params))
        ref = jax.block_until_ready(_reference_block(x, params))

        assert out.shape == (N, C, Hh, Ww), out.shape
        max_err = float(jnp.max(jnp.abs(out - ref)))
        assert jnp.allclose(out, ref, atol=2e-2, rtol=2e-2), (N, Hh, Ww, max_err)
    print("KERNEL_OK")
</pallas_src>

<mosaic_0001>
module attributes {stable_mosaic.version = 11 : i64} {
  func.func @_basic_block_kernel(%arg0: i32, %arg1: memref<1x4x256xf32, #tpu.memory_space<vmem>>, %arg2: memref<25x256xf32, #tpu.memory_space<vmem>>, %arg3: memref<4x100xbf16, #tpu.memory_space<vmem>>, %arg4: memref<4x100xbf16, #tpu.memory_space<vmem>>, %arg5: memref<4x4xf32, #tpu.memory_space<vmem>>, %arg6: memref<1x4x256xf32, #tpu.memory_space<vmem>>, %arg7: memref<100x256xbf16, #tpu.memory_space<vmem>>) attributes {dimension_semantics = [#tpu.dimension_semantics<parallel>], iteration_bounds = array<i64: 2>, scalar_prefetch = 0 : i64, scratch_operands = 1 : i64, tpu.core_type = #tpu.core_type<tc>, window_params = [{transform_indices = @transform_0, window_bounds = array<i64: 1, 4, 256>}, {pipeline_mode = #tpu.pipeline_mode<synchronous>, transform_indices = @transform_1, window_bounds = array<i64: 25, 256>}, {pipeline_mode = #tpu.pipeline_mode<synchronous>, transform_indices = @transform_2, window_bounds = array<i64: 4, 100>}, {pipeline_mode = #tpu.pipeline_mode<synchronous>, transform_indices = @transform_3, window_bounds = array<i64: 4, 100>}, {pipeline_mode = #tpu.pipeline_mode<synchronous>, transform_indices = @transform_4, window_bounds = array<i64: 4, 4>}, {transform_indices = @transform_5, window_bounds = array<i64: 1, 4, 256>}]} {
    %c0 = arith.constant 0 : index
    %c0_0 = arith.constant 0 : index
    %0 = vector.load %arg5[%c0, %c0_0] : memref<4x4xf32, #tpu.memory_space<vmem>>, vector<4x4xf32>
    %c0_1 = arith.constant 0 : index
    %c0_2 = arith.constant 0 : index
    %c0_3 = arith.constant 0 : index
    %1 = vector.load %arg1[%c0_1, %c0_2, %c0_3] : memref<1x4x256xf32, #tpu.memory_space<vmem>>, vector<1x4x256xf32>
    %2 = vector.shape_cast %1 : vector<1x4x256xf32> to vector<4x256xf32>
    %c0_4 = arith.constant 0 : index
    %c0_5 = arith.constant 0 : index
    %3 = vector.load %arg2[%c0_4, %c0_5] : memref<25x256xf32, #tpu.memory_space<vmem>>, vector<1x256xf32>
    %c34_i32 = arith.constant 34 : i32
    %4 = tpu.dynamic_rotate %2 by %c34_i32 dim 1 : vector<4x256xf32>, i32 -> vector<4x256xf32>
    %5 = vector.broadcast %3 : vector<1x256xf32> to vector<4x256xf32>
    %6 = arith.mulf %4, %5 : vector<4x256xf32>
    %7 = arith.truncf %6 : vector<4x256xf32> to vector<4x256xbf16>
    %c0_6 = arith.constant 0 : index
    %c0_7 = arith.constant 0 : index
    %8 = vector.load %arg7[%c0_6, %c0_7] : memref<100x256xbf16, #tpu.memory_space<vmem>>, vector<4x256xbf16>
    tpu.vector_store %arg7[%c0_6, %c0_7], %7 {strides = array<i32>} : memref<100x256xbf16, #tpu.memory_space<vmem>>, vector<4x256xbf16>,
    %c1 = arith.constant 1 : index
    %c0_8 = arith.constant 0 : index
    %9 = vector.load %arg2[%c1, %c0_8] : memref<25x256xf32, #tpu.memory_space<vmem>>, vector<1x256xf32>
    %c33_i32 = arith.constant 33 : i32
    %10 = tpu.dynamic_rotate %2 by %c33_i32 dim 1 : vector<4x256xf32>, i32 -> vector<4x256xf32>
    %11 = vector.broadcast %9 : vector<1x256xf32> to vector<4x256xf32>
    %12 = arith.mulf %10, %11 : vector<4x256xf32>
    %13 = arith.truncf %12 : vector<4x256xf32> to vector<4x256xbf16>
    %c4 = arith.constant 4 : index
    %c0_9 = arith.constant 0 : index
    %14 = vector.load %arg7[%c4, %c0_9] : memref<100x256xbf16, #tpu.memory_space<vmem>>, vector<4x256xbf16>
    tpu.vector_store %arg7[%c4, %c0_9], %13 {strides = array<i32>} : memref<100x256xbf16, #tpu.memory_space<vmem>>, vector<4x256xbf16>,
    %c2 = arith.constant 2 : index
    %c0_10 = arith.constant 0 : index
    %15 = vector.load %arg2[%c2, %c0_10] : memref<25x256xf32, #tpu.memory_space<vmem>>, vector<1x256xf32>
    %c32_i32 = arith.constant 32 : i32
    %16 = tpu.dynamic_rotate %2 by %c32_i32 dim 1 : vector<4x256xf32>, i32 -> vector<4x256xf32>
    %17 = vector.broadcast %15 : vector<1x256xf32> to vector<4x256xf32>
    %18 = arith.mulf %16, %17 : vector<4x256xf32>
    %19 = arith.truncf %18 : vector<4x256xf32> to vector<4x256xbf16>
    %c8 = arith.constant 8 : index
    %c0_11 = arith.constant 0 : index
    %20 = vector.load %arg7[%c8, %c0_11] : memref<100x256xbf16, #tpu.memory_space<vmem>>, vector<4x256xbf16>
    tpu.vector_store %arg7[%c8, %c0_11], %19 {strides = array<i32>} : memref<100x256xbf16, #tpu.memory_space<vmem>>, vector<4x256xbf16>,
    %c3 = arith.constant 3 : index
    %c0_12 = arith.constant 0 : index
    %21 = vector.load %arg2[%c3, %c0_12] : memref<25x256xf32, #tpu.memory_space<vmem>>, vector<1x256xf32>
    %c31_i32 = arith.constant 31 : i32
    %22 = tpu.dynamic_rotate %2 by %c31_i32 dim 1 : vector<4x256xf32>, i32 -> vector<4x256xf32>
    %23 = vector.broadcast %21 : vector<1x256xf32> to vector<4x256xf32>
    %24 = arith.mulf %22, %23 : vector<4x256xf32>
    %25 = arith.truncf %24 : vector<4x256xf32> to vector<4x256xbf16>
    %c12 = arith.constant 12 : index
    %c0_13 = arith.constant 0 : index
    %26 = vector.load %arg7[%c12, %c0_13] : memref<100x256xbf16, #tpu.memory_space<vmem>>, vector<4x256xbf16>
    tpu.vector_store %arg7[%c12, %c0_13], %25 {strides = array<i32>} : memref<100x256xbf16, #tpu.memory_space<vmem>>, vector<4x256xbf16>,
    %c4_14 = arith.constant 4 : index
    %c0_15 = arith.constant 0 : index
    %27 = vector.load %arg2[%c4_14, %c0_15] : memref<25x256xf32, #tpu.memory_space<vmem>>, vector<1x256xf32>
    %c30_i32 = arith.constant 30 : i32
    %28 = tpu.dynamic_rotate %2 by %c30_i32 dim 1 : vector<4x256xf32>, i32 -> vector<4x256xf32>
    %29 = vector.broadcast %27 : vector<1x256xf32> to vector<4x256xf32>
    %30 = arith.mulf %28, %29 : vector<4x256xf32>
    %31 = arith.truncf %30 : vector<4x256xf32> to vector<4x256xbf16>
    %c16 = arith.constant 16 : index
    %c0_16 = arith.constant 0 : index
    %32 = vector.load %arg7[%c16, %c0_16] : memref<100x256xbf16, #tpu.memory_space<vmem>>, vector<4x256xbf16>
    tpu.vector_store %arg7[%c16, %c0_16], %31 {strides = array<i32>} : memref<100x256xbf16, #tpu.memory_space<vmem>>, vector<4x256xbf16>,
    %c5 = arith.constant 5 : index
    %c0_17 = arith.constant 0 : index
    %33 = vector.load %arg2[%c5, %c0_17] : memref<25x256xf32, #tpu.memory_space<vmem>>, vector<1x256xf32>
    %c18_i32 = arith.constant 18 : i32
    %34 = tpu.dynamic_rotate %2 by %c18_i32 dim 1 : vector<4x256xf32>, i32 -> vector<4x256xf32>
    %35 = vector.broadcast %33 : vector<1x256xf32> to vector<4x256xf32>
    %36 = arith.mulf %34, %35 : vector<4x256xf32>
    %37 = arith.truncf %36 : vector<4x256xf32> to vector<4x256xbf16>
    %c20 = arith.constant 20 : index
    %c0_18 = arith.constant 0 : index
    %38 = vector.load %arg7[%c20, %c0_18] : memref<100x256xbf16, #tpu.memory_space<vmem>>, vector<4x256xbf16>
    tpu.vector_store %arg7[%c20, %c0_18], %37 {strides = array<i32>} : memref<100x256xbf16, #tpu.memory_space<vmem>>, vector<4x256xbf16>,
    %c6 = arith.constant 6 : index
    %c0_19 = arith.constant 0 : index
    %39 = vector.load %arg2[%c6, %c0_19] : memref<25x256xf32, #tpu.memory_space<vmem>>, vector<1x256xf32>
    %c17_i32 = arith.constant 17 : i32
    %40 = tpu.dynamic_rotate %2 by %c17_i32 dim 1 : vector<4x256xf32>, i32 -> vector<4x256xf32>
    %41 = vector.broadcast %39 : vector<1x256xf32> to vector<4x256xf32>
    %42 = arith.mulf %40, %41 : vector<4x256xf32>
    %43 = arith.truncf %42 : vector<4x256xf32> to vector<4x256xbf16>
    %c24 = arith.constant 24 : index
    %c0_20 = arith.constant 0 : index
    %44 = vector.load %arg7[%c24, %c0_20] : memref<100x256xbf16, #tpu.memory_space<vmem>>, vector<4x256xbf16>
    tpu.vector_store %arg7[%c24, %c0_20], %43 {strides = array<i32>} : memref<100x256xbf16, #tpu.memory_space<vmem>>, vector<4x256xbf16>,
    %c7 = arith.constant 7 : index
    %c0_21 = arith.constant 0 : index
    %45 = vector.load %arg2[%c7, %c0_21] : memref<25x256xf32, #tpu.memory_space<vmem>>, vector<1x256xf32>
    %c16_i32 = arith.constant 16 : i32
    %46 = tpu.dynamic_rotate %2 by %c16_i32 dim 1 : vector<4x256xf32>, i32 -> vector<4x256xf32>
    %47 = vector.broadcast %45 : vector<1x256xf32> to vector<4x256xf32>
    %48 = arith.mulf %46, %47 : vector<4x256xf32>
    %49 = arith.truncf %48 : vector<4x256xf32> to vector<4x256xbf16>
    %c28 = arith.constant 28 : index
    %c0_22 = arith.constant 0 : index
    %50 = vector.load %arg7[%c28, %c0_22] : memref<100x256xbf16, #tpu.memory_space<vmem>>, vector<4x256xbf16>
    tpu.vector_store %arg7[%c28, %c0_22], %49 {strides = array<i32>} : memref<100x256xbf16, #tpu.memory_space<vmem>>, vector<4x256xbf16>,
    %c8_23 = arith.constant 8 : index
    %c0_24 = arith.constant 0 : index
    %51 = vector.load %arg2[%c8_23, %c0_24] : memref<25x256xf32, #tpu.memory_space<vmem>>, vector<1x256xf32>
    %c15_i32 = arith.constant 15 : i32
    %52 = tpu.dynamic_rotate %2 by %c15_i32 dim 1 : vector<4x256xf32>, i32 -> vector<4x256xf32>
    %53 = vector.broadcast %51 : vector<1x256xf32> to vector<4x256xf32>
    %54 = arith.mulf %52, %53 : vector<4x256xf32>
    %55 = arith.truncf %54 : vector<4x256xf32> to vector<4x256xbf16>
    %c32 = arith.constant 32 : index
    %c0_25 = arith.constant 0 : index
    %56 = vector.load %arg7[%c32, %c0_25] : memref<100x256xbf16, #tpu.memory_space<vmem>>, vector<4x256xbf16>
    tpu.vector_store %arg7[%c32, %c0_25], %55 {strides = array<i32>} : memref<100x256xbf16, #tpu.memory_space<vmem>>, vector<4x256xbf16>,
    %c9 = arith.constant 9 : index
    %c0_26 = arith.constant 0 : index
    %57 = vector.load %arg2[%c9, %c0_26] : memref<25x256xf32, #tpu.memory_space<vmem>>, vector<1x256xf32>
    %c14_i32 = arith.constant 14 : i32
    %58 = tpu.dynamic_rotate %2 by %c14_i32 dim 1 : vector<4x256xf32>, i32 -> vector<4x256xf32>
    %59 = vector.broadcast %57 : vector<1x256xf32> to vector<4x256xf32>
    %60 = arith.mulf %58, %59 : vector<4x256xf32>
    %61 = arith.truncf %60 : vector<4x256xf32> to vector<4x256xbf16>
    %c36 = arith.constant 36 : index
    %c0_27 = arith.constant 0 : index
    %62 = vector.load %arg7[%c36, %c0_27] : memref<100x256xbf16, #tpu.memory_space<vmem>>, vector<4x256xbf16>
    tpu.vector_store %arg7[%c36, %c0_27], %61 {strides = array<i32>} : memref<100x256xbf16, #tpu.memory_space<vmem>>, vector<4x256xbf16>,
    %c10 = arith.constant 10 : index
    %c0_28 = arith.constant 0 : index
    %63 = vector.load %arg2[%c10, %c0_28] : memref<25x256xf32, #tpu.memory_space<vmem>>, vector<1x256xf32>
    %c2_i32 = arith.constant 2 : i32
    %64 = tpu.dynamic_rotate %2 by %c2_i32 dim 1 : vector<4x256xf32>, i32 -> vector<4x256xf32>
    %65 = vector.broadcast %63 : vector<1x256xf32> to vector<4x256xf32>
    %66 = arith.mulf %64, %65 : vector<4x256xf32>
    %67 = arith.truncf %66 : vector<4x256xf32> to vector<4x256xbf16>
    %c40 = arith.constant 40 : index
    %c0_29 = arith.constant 0 : index
    %68 = vector.load %arg7[%c40, %c0_29] : memref<100x256xbf16, #tpu.memory_space<vmem>>, vector<4x256xbf16>
    tpu.vector_store %arg7[%c40, %c0_29], %67 {strides = array<i32>} : memref<100x256xbf16, #tpu.memory_space<vmem>>, vector<4x256xbf16>,
    %c11 = arith.constant 11 : index
    %c0_30 = arith.constant 0 : index
    %69 = vector.load %arg2[%c11, %c0_30] : memref<25x256xf32, #tpu.memory_space<vmem>>, vector<1x256xf32>
    %c1_i32 = arith.constant 1 : i32
    %70 = tpu.dynamic_rotate %2 by %c1_i32 dim 1 : vector<4x256xf32>, i32 -> vector<4x256xf32>
    %71 = vector.broadcast %69 : vector<1x256xf32> to vector<4x256xf32>
    %72 = arith.mulf %70, %71 : vector<4x256xf32>
    %73 = arith.truncf %72 : vector<4x256xf32> to vector<4x256xbf16>
    %c44 = arith.constant 44 : index
    %c0_31 = arith.constant 0 : index
    %74 = vector.load %arg7[%c44, %c0_31] : memref<100x256xbf16, #tpu.memory_space<vmem>>, vector<4x256xbf16>
    tpu.vector_store %arg7[%c44, %c0_31], %73 {strides = array<i32>} : memref<100x256xbf16, #tpu.memory_space<vmem>>, vector<4x256xbf16>,
    %c12_32 = arith.constant 12 : index
    %c0_33 = arith.constant 0 : index
    %75 = vector.load %arg2[%c12_32, %c0_33] : memref<25x256xf32, #tpu.memory_space<vmem>>, vector<1x256xf32>
    %76 = vector.broadcast %75 : vector<1x256xf32> to vector<4x256xf32>
    %77 = arith.mulf %2, %76 : vector<4x256xf32>
    %78 = arith.truncf %77 : vector<4x256xf32> to vector<4x256xbf16>
    %c48 = arith.constant 48 : index
    %c0_34 = arith.constant 0 : index
    %79 = vector.load %arg7[%c48, %c0_34] : memref<100x256xbf16, #tpu.memory_space<vmem>>, vector<4x256xbf16>
    tpu.vector_store %arg7[%c48, %c0_34], %78 {strides = array<i32>} : memref<100x256xbf16, #tpu.memory_space<vmem>>, vector<4x256xbf16>,
    %c13 = arith.constant 13 : index
    %c0_35 = arith.constant 0 : index
    %80 = vector.load %arg2[%c13, %c0_35] : memref<25x256xf32, #tpu.memory_space<vmem>>, vector<1x256xf32>
    %c255_i32 = arith.constant 255 : i32
    %81 = tpu.dynamic_rotate %2 by %c255_i32 dim 1 : vector<4x256xf32>, i32 -> vector<4x256xf32>
    %82 = vector.broadcast %80 : vector<1x256xf32> to vector<4x256xf32>
    %83 = arith.mulf %81, %82 : vector<4x256xf32>
    %84 = arith.truncf %83 : vector<4x256xf32> to vector<4x256xbf16>
    %c52 = arith.constant 52 : index
    %c0_36 = arith.constant 0 : index
    %85 = vector.load %arg7[%c52, %c0_36] : memref<100x256xbf16, #tpu.memory_space<vmem>>, vector<4x256xbf16>
    tpu.vector_store %arg7[%c52, %c0_36], %84 {strides = array<i32>} : memref<100x256xbf16, #tpu.memory_space<vmem>>, vector<4x256xbf16>,
    %c14 = arith.constant 14 : index
    %c0_37 = arith.constant 0 : index
    %86 = vector.load %arg2[%c14, %c0_37] : memref<25x256xf32, #tpu.memory_space<vmem>>, vector<1x256xf32>
    %c254_i32 = arith.constant 254 : i32
    %87 = tpu.dynamic_rotate %2 by %c254_i32 dim 1 : vector<4x256xf32>, i32 -> vector<4x256xf32>
    %88 = vector.broadcast %86 : vector<1x256xf32> to vector<4x256xf32>
    %89 = arith.mulf %87, %88 : vector<4x256xf32>
    %90 = arith.truncf %89 : vector<4x256xf32> to vector<4x256xbf16>
    %c56 = arith.constant 56 : index
    %c0_38 = arith.constant 0 : index
    %91 = vector.load %arg7[%c56, %c0_38] : memref<100x256xbf16, #tpu.memory_space<vmem>>, vector<4x256xbf16>
    tpu.vector_store %arg7[%c56, %c0_38], %90 {strides = array<i32>} : memref<100x256xbf16, #tpu.memory_space<vmem>>, vector<4x256xbf16>,
    %c15 = arith.constant 15 : index
    %c0_39 = arith.constant 0 : index
    %92 = vector.load %arg2[%c15, %c0_39] : memref<25x256xf32, #tpu.memory_space<vmem>>, vector<1x256xf32>
    %c242_i32 = arith.constant 242 : i32
    %93 = tpu.dynamic_rotate %2 by %c242_i32 dim 1 : vector<4x256xf32>, i32 -> vector<4x256xf32>
    %94 = vector.broadcast %92 : vector<1x256xf32> to vector<4x256xf32>
    %95 = arith.mulf %93, %94 : vector<4x256xf32>
    %96 = arith.truncf %95 : vector<4x256xf32> to vector<4x256xbf16>
    %c60 = arith.constant 60 : index
    %c0_40 = arith.constant 0 : index
    %97 = vector.load %arg7[%c60, %c0_40] : memref<100x256xbf16, #tpu.memory_space<vmem>>, vector<4x256xbf16>
    tpu.vector_store %arg7[%c60, %c0_40], %96 {strides = array<i32>} : memref<100x256xbf16, #tpu.memory_space<vmem>>, vector<4x256xbf16>,
    %c16_41 = arith.constant 16 : index
    %c0_42 = arith.constant 0 : index
    %98 = vector.load %arg2[%c16_41, %c0_42] : memref<25x256xf32, #tpu.memory_space<vmem>>, vector<1x256xf32>
    %c241_i32 = arith.constant 241 : i32
    %99 = tpu.dynamic_rotate %2 by %c241_i32 dim 1 : vector<4x256xf32>, i32 -> vector<4x256xf32>
    %100 = vector.broadcast %98 : vector<1x256xf32> to vector<4x256xf32>
    %101 = arith.mulf %99, %100 : vector<4x256xf32>
    %102 = arith.truncf %101 : vector<4x256xf32> to vector<4x256xbf16>
    %c64 = arith.constant 64 : index
    %c0_43 = arith.constant 0 : index
    %103 = vector.load %arg7[%c64, %c0_43] : memref<100x256xbf16, #tpu.memory_space<vmem>>, vector<4x256xbf16>
    tpu.vector_store %arg7[%c64, %c0_43], %102 {strides = array<i32>} : memref<100x256xbf16, #tpu.memory_space<vmem>>, vector<4x256xbf16>,
    %c17 = arith.constant 17 : index
    %c0_44 = arith.constant 0 : index
    %104 = vector.load %arg2[%c17, %c0_44] : memref<25x256xf32, #tpu.memory_space<vmem>>, vector<1x256xf32>
    %c240_i32 = arith.constant 240 : i32
    %105 = tpu.dynamic_rotate %2 by %c240_i32 dim 1 : vector<4x256xf32>, i32 -> vector<4x256xf32>
    %106 = vector.broadcast %104 : vector<1x256xf32> to vector<4x256xf32>
    %107 = arith.mulf %105, %106 : vector<4x256xf32>
    %108 = arith.truncf %107 : vector<4x256xf32> to vector<4x256xbf16>
    %c68 = arith.constant 68 : index
    %c0_45 = arith.constant 0 : index
    %109 = vector.load %arg7[%c68, %c0_45] : memref<100x256xbf16, #tpu.memory_space<vmem>>, vector<4x256xbf16>
    tpu.vector_store %arg7[%c68, %c0_45], %108 {strides = array<i32>} : memref<100x256xbf16, #tpu.memory_space<vmem>>, vector<4x256xbf16>,
    %c18 = arith.constant 18 : index
    %c0_46 = arith.constant 0 : index
    %110 = vector.load %arg2[%c18, %c0_46] : memref<25x256xf32, #tpu.memory_space<vmem>>, vector<1x256xf32>
    %c239_i32 = arith.constant 239 : i32
    %111 = tpu.dynamic_rotate %2 by %c239_i32 dim 1 : vector<4x256xf32>, i32 -> vector<4x256xf32>
    %112 = vector.broadcast %110 : vector<1x256xf32> to vector<4x256xf32>
    %113 = arith.mulf %111, %112 : vector<4x256xf32>
    %114 = arith.truncf %113 : vector<4x256xf32> to vector<4x256xbf16>
    %c72 = arith.constant 72 : index
    %c0_47 = arith.constant 0 : index
    %115 = vector.load %arg7[%c72, %c0_47] : memref<100x256xbf16, #tpu.memory_space<vmem>>, vector<4x256xbf16>
    tpu.vector_store %arg7[%c72, %c0_47], %114 {strides = array<i32>} : memref<100x256xbf16, #tpu.memory_space<vmem>>, vector<4x256xbf16>,
    %c19 = arith.constant 19 : index
    %c0_48 = arith.constant 0 : index
    %116 = vector.load %arg2[%c19, %c0_48] : memref<25x256xf32, #tpu.memory_space<vmem>>, vector<1x256xf32>
    %c238_i32 = arith.constant 238 : i32
    %117 = tpu.dynamic_rotate %2 by %c238_i32 dim 1 : vector<4x256xf32>, i32 -> vector<4x256xf32>
    %118 = vector.broadcast %116 : vector<1x256xf32> to vector<4x256xf32>
    %119 = arith.mulf %117, %118 : vector<4x256xf32>
    %120 = arith.truncf %119 : vector<4x256xf32> to vector<4x256xbf16>
    %c76 = arith.constant 76 : index
    %c0_49 = arith.constant 0 : index
    %121 = vector.load %arg7[%c76, %c0_49] : memref<100x256xbf16, #tpu.memory_space<vmem>>, vector<4x256xbf16>
    tpu.vector_store %arg7[%c76, %c0_49], %120 {strides = array<i32>} : memref<100x256xbf16, #tpu.memory_space<vmem>>, vector<4x256xbf16>,
    %c20_50 = arith.constant 20 : index
    %c0_51 = arith.constant 0 : index
    %122 = vector.load %arg2[%c20_50, %c0_51] : memref<25x256xf32, #tpu.memory_space<vmem>>, vector<1x256xf32>
    %c226_i32 = arith.constant 226 : i32
    %123 = tpu.dynamic_rotate %2 by %c226_i32 dim 1 : vector<4x256xf32>, i32 -> vector<4x256xf32>
    %124 = vector.broadcast %122 : vector<1x256xf32> to vector<4x256xf32>
    %125 = arith.mulf %123, %124 : vector<4x256xf32>
    %126 = arith.truncf %125 : vector<4x256xf32> to vector<4x256xbf16>
    %c80 = arith.constant 80 : index
    %c0_52 = arith.constant 0 : index
    %127 = vector.load %arg7[%c80, %c0_52] : memref<100x256xbf16, #tpu.memory_space<vmem>>, vector<4x256xbf16>
    tpu.vector_store %arg7[%c80, %c0_52], %126 {strides = array<i32>} : memref<100x256xbf16, #tpu.memory_space<vmem>>, vector<4x256xbf16>,
    %c21 = arith.constant 21 : index
    %c0_53 = arith.constant 0 : index
    %128 = vector.load %arg2[%c21, %c0_53] : memref<25x256xf32, #tpu.memory_space<vmem>>, vector<1x256xf32>
    %c225_i32 = arith.constant 225 : i32
    %129 = tpu.dynamic_rotate %2 by %c225_i32 dim 1 : vector<4x256xf32>, i32 -> vector<4x256xf32>
    %130 = vector.broadcast %128 : vector<1x256xf32> to vector<4x256xf32>
    %131 = arith.mulf %129, %130 : vector<4x256xf32>
    %132 = arith.truncf %131 : vector<4x256xf32> to vector<4x256xbf16>
    %c84 = arith.constant 84 : index
    %c0_54 = arith.constant 0 : index
    %133 = vector.load %arg7[%c84, %c0_54] : memref<100x256xbf16, #tpu.memory_space<vmem>>, vector<4x256xbf16>
    tpu.vector_store %arg7[%c84, %c0_54], %132 {strides = array<i32>} : memref<100x256xbf16, #tpu.memory_space<vmem>>, vector<4x256xbf16>,
    %c22 = arith.constant 22 : index
    %c0_55 = arith.constant 0 : index
    %134 = vector.load %arg2[%c22, %c0_55] : memref<25x256xf32, #tpu.memory_space<vmem>>, vector<1x256xf32>
    %c224_i32 = arith.constant 224 : i32
    %135 = tpu.dynamic_rotate %2 by %c224_i32 dim 1 : vector<4x256xf32>, i32 -> vector<4x256xf32>
    %136 = vector.broadcast %134 : vector<1x256xf32> to vector<4x256xf32>
    %137 = arith.mulf %135, %136 : vector<4x256xf32>
    %138 = arith.truncf %137 : vector<4x256xf32> to vector<4x256xbf16>
    %c88 = arith.constant 88 : index
    %c0_56 = arith.constant 0 : index
    %139 = vector.load %arg7[%c88, %c0_56] : memref<100x256xbf16, #tpu.memory_space<vmem>>, vector<4x256xbf16>
    tpu.vector_store %arg7[%c88, %c0_56], %138 {strides = array<i32>} : memref<100x256xbf16, #tpu.memory_space<vmem>>, vector<4x256xbf16>,
    %c23 = arith.constant 23 : index
    %c0_57 = arith.constant 0 : index
    %140 = vector.load %arg2[%c23, %c0_57] : memref<25x256xf32, #tpu.memory_space<vmem>>, vector<1x256xf32>
    %c223_i32 = arith.constant 223 : i32
    %141 = tpu.dynamic_rotate %2 by %c223_i32 dim 1 : vector<4x256xf32>, i32 -> vector<4x256xf32>
    %142 = vector.broadcast %140 : vector<1x256xf32> to vector<4x256xf32>
    %143 = arith.mulf %141, %142 : vector<4x256xf32>
    %144 = arith.truncf %143 : vector<4x256xf32> to vector<4x256xbf16>
    %c92 = arith.constant 92 : index
    %c0_58 = arith.constant 0 : index
    %145 = vector.load %arg7[%c92, %c0_58] : memref<100x256xbf16, #tpu.memory_space<vmem>>, vector<4x256xbf16>
    tpu.vector_store %arg7[%c92, %c0_58], %144 {strides = array<i32>} : memref<100x256xbf16, #tpu.memory_space<vmem>>, vector<4x256xbf16>,
    %c24_59 = arith.constant 24 : index
    %c0_60 = arith.constant 0 : index
    %146 = vector.load %arg2[%c24_59, %c0_60] : memref<25x256xf32, #tpu.memory_space<vmem>>, vector<1x256xf32>
    %c222_i32 = arith.constant 222 : i32
    %147 = tpu.dynamic_rotate %2 by %c222_i32 dim 1 : vector<4x256xf32>, i32 -> vector<4x256xf32>
    %148 = vector.broadcast %146 : vector<1x256xf32> to vector<4x256xf32>
    %149 = arith.mulf %147, %148 : vector<4x256xf32>
    %150 = arith.truncf %149 : vector<4x256xf32> to vector<4x256xbf16>
    %c96 = arith.constant 96 : index
    %c0_61 = arith.constant 0 : index
    %151 = vector.load %arg7[%c96, %c0_61] : memref<100x256xbf16, #tpu.memory_space<vmem>>, vector<4x256xbf16>
    tpu.vector_store %arg7[%c96, %c0_61], %150 {strides = array<i32>} : memref<100x256xbf16, #tpu.memory_space<vmem>>, vector<4x256xbf16>,
    %c0_62 = arith.constant 0 : index
    %c0_63 = arith.constant 0 : index
    %152 = vector.load %arg3[%c0_62, %c0_63] : memref<4x100xbf16, #tpu.memory_space<vmem>>, vector<4x100xbf16>
    %c0_64 = arith.constant 0 : index
    %c0_65 = arith.constant 0 : index
    %153 = vector.load %arg7[%c0_64, %c0_65] : memref<100x256xbf16, #tpu.memory_space<vmem>>, vector<100x256xbf16>
    %cst = arith.constant dense<0.000000e+00> : vector<4x256xf32>
    %154 = tpu.matmul %152, %153, %cst {dimension_numbers = #tpu.dot_dimension_numbers<[1], [0], [0], [1], [0, 0, 1, 1], [], []>} : vector<4x100xbf16>, vector<100x256xbf16>, vector<4x256xf32> -> vector<4x256xf32>
    %155 = vector.extract_strided_slice %0 {offsets = [0, 0], sizes = [4, 1], strides = [1, 1]} : vector<4x4xf32> to vector<4x1xf32>
    %156 = vector.broadcast %155 : vector<4x1xf32> to vector<4x256xf32>
    %157 = arith.mulf %154, %156 : vector<4x256xf32>
    %158 = vector.extract_strided_slice %0 {offsets = [0, 1], sizes = [4, 1], strides = [1, 1]} : vector<4x4xf32> to vector<4x1xf32>
    %159 = vector.broadcast %158 : vector<4x1xf32> to vector<4x256xf32>
    %160 = arith.addf %157, %159 : vector<4x256xf32>
    %cst_66 = arith.constant 0.000000e+00 : f32
    %161 = vector.broadcast %cst_66 : f32 to vector<4x256xf32>
    %162 = arith.maximumf %160, %161 : vector<4x256xf32>
    %c0_67 = arith.constant 0 : index
    %c0_68 = arith.constant 0 : index
    %163 = vector.load %arg2[%c0_67, %c0_68] : memref<25x256xf32, #tpu.memory_space<vmem>>, vector<1x256xf32>
    %c34_i32_69 = arith.constant 34 : i32
    %164 = tpu.dynamic_rotate %162 by %c34_i32_69 dim 1 : vector<4x256xf32>, i32 -> vector<4x256xf32>
    %165 = vector.broadcast %163 : vector<1x256xf32> to vector<4x256xf32>
    %166 = arith.mulf %164, %165 : vector<4x256xf32>
    %167 = arith.truncf %166 : vector<4x256xf32> to vector<4x256xbf16>
    %c0_70 = arith.constant 0 : index
    %c0_71 = arith.constant 0 : index
    %168 = vector.load %arg7[%c0_70, %c0_71] : memref<100x256xbf16, #tpu.memory_space<vmem>>, vector<4x256xbf16>
    tpu.vector_store %arg7[%c0_70, %c0_71], %167 {strides = array<i32>} : memref<100x256xbf16, #tpu.memory_space<vmem>>, vector<4x256xbf16>,
    %c1_72 = arith.constant 1 : index
    %c0_73 = arith.constant 0 : index
    %169 = vector.load %arg2[%c1_72, %c0_73] : memref<25x256xf32, #tpu.memory_space<vmem>>, vector<1x256xf32>
    %c33_i32_74 = arith.constant 33 : i32
    %170 = tpu.dynamic_rotate %162 by %c33_i32_74 dim 1 : vector<4x256xf32>, i32 -> vector<4x256xf32>
    %171 = vector.broadcast %169 : vector<1x256xf32> to vector<4x256xf32>
    %172 = arith.mulf %170, %171 : vector<4x256xf32>
    %173 = arith.truncf %172 : vector<4x256xf32> to vector<4x256xbf16>
    %c4_75 = arith.constant 4 : index
    %c0_76 = arith.constant 0 : index
    %174 = vector.load %arg7[%c4_75, %c0_76] : memref<100x256xbf16, #tpu.memory_space<vmem>>, vector<4x256xbf16>
    tpu.vector_store %arg7[%c4_75, %c0_76], %173 {strides = array<i32>} : memref<100x256xbf16, #tpu.memory_space<vmem>>, vector<4x256xbf16>,
    %c2_77 = arith.constant 2 : index
    %c0_78 = arith.constant 0 : index
    %175 = vector.load %arg2[%c2_77, %c0_78] : memref<25x256xf32, #tpu.memory_space<vmem>>, vector<1x256xf32>
    %c32_i32_79 = arith.constant 32 : i32
    %176 = tpu.dynamic_rotate %162 by %c32_i32_79 dim 1 : vector<4x256xf32>, i32 -> vector<4x256xf32>
    %177 = vector.broadcast %175 : vector<1x256xf32> to vector<4x256xf32>
    %178 = arith.mulf %176, %177 : vector<4x256xf32>
    %179 = arith.truncf %178 : vector<4x256xf32> to vector<4x256xbf16>
    %c8_80 = arith.constant 8 : index
    %c0_81 = arith.constant 0 : index
    %180 = vector.load %arg7[%c8_80, %c0_81] : memref<100x256xbf16, #tpu.memory_space<vmem>>, vector<4x256xbf16>
    tpu.vector_store %arg7[%c8_80, %c0_81], %179 {strides = array<i32>} : memref<100x256xbf16, #tpu.memory_space<vmem>>, vector<4x256xbf16>,
    %c3_82 = arith.constant 3 : index
    %c0_83 = arith.constant 0 : index
    %181 = vector.load %arg2[%c3_82, %c0_83] : memref<25x256xf32, #tpu.memory_space<vmem>>, vector<1x256xf32>
    %c31_i32_84 = arith.constant 31 : i32
    %182 = tpu.dynamic_rotate %162 by %c31_i32_84 dim 1 : vector<4x256xf32>, i32 -> vector<4x256xf32>
    %183 = vector.broadcast %181 : vector<1x256xf32> to vector<4x256xf32>
    %184 = arith.mulf %182, %183 : vector<4x256xf32>
    %185 = arith.truncf %184 : vector<4x256xf32> to vector<4x256xbf16>
    %c12_85 = arith.constant 12 : index
    %c0_86 = arith.constant 0 : index
    %186 = vector.load %arg7[%c12_85, %c0_86] : memref<100x256xbf16, #tpu.memory_space<vmem>>, vector<4x256xbf16>
    tpu.vector_store %arg7[%c12_85, %c0_86], %185 {strides = array<i32>} : memref<100x256xbf16, #tpu.memory_space<vmem>>, vector<4x256xbf16>,
    %c4_87 = arith.constant 4 : index
    %c0_88 = arith.constant 0 : index
    %187 = vector.load %arg2[%c4_87, %c0_88] : memref<25x256xf32, #tpu.memory_space<vmem>>, vector<1x256xf32>
    %c30_i32_89 = arith.constant 30 : i32
    %188 = tpu.dynamic_rotate %162 by %c30_i32_89 dim 1 : vector<4x256xf32>, i32 -> vector<4x256xf32>
    %189 = vector.broadcast %187 : vector<1x256xf32> to vector<4x256xf32>
    %190 = arith.mulf %188, %189 : vector<4x256xf32>
    %191 = arith.truncf %190 : vector<4x256xf32> to vector<4x256xbf16>
    %c16_90 = arith.constant 16 : index
    %c0_91 = arith.constant 0 : index
    %192 = vector.load %arg7[%c16_90, %c0_91] : memref<100x256xbf16, #tpu.memory_space<vmem>>, vector<4x256xbf16>
    tpu.vector_store %arg7[%c16_90, %c0_91], %191 {strides = array<i32>} : memref<100x256xbf16, #tpu.memory_space<vmem>>, vector<4x256xbf16>,
    %c5_92 = arith.constant 5 : index
    %c0_93 = arith.constant 0 : index
    %193 = vector.load %arg2[%c5_92, %c0_93] : memref<25x256xf32, #tpu.memory_space<vmem>>, vector<1x256xf32>
    %c18_i32_94 = arith.constant 18 : i32
    %194 = tpu.dynamic_rotate %162 by %c18_i32_94 dim 1 : vector<4x256xf32>, i32 -> vector<4x256xf32>
    %195 = vector.broadcast %193 : vector<1x256xf32> to vector<4x256xf32>
    %196 = arith.mulf %194, %195 : vector<4x256xf32>
    %197 = arith.truncf %196 : vector<4x256xf32> to vector<4x256xbf16>
    %c20_95 = arith.constant 20 : index
    %c0_96 = arith.constant 0 : index
    %198 = vector.load %arg7[%c20_95, %c0_96] : memref<100x256xbf16, #tpu.memory_space<vmem>>, vector<4x256xbf16>
    tpu.vector_store %arg7[%c20_95, %c0_96], %197 {strides = array<i32>} : memref<100x256xbf16, #tpu.memory_space<vmem>>, vector<4x256xbf16>,
    %c6_97 = arith.constant 6 : index
    %c0_98 = arith.constant 0 : index
    %199 = vector.load %arg2[%c6_97, %c0_98] : memref<25x256xf32, #tpu.memory_space<vmem>>, vector<1x256xf32>
    %c17_i32_99 = arith.constant 17 : i32
    %200 = tpu.dynamic_rotate %162 by %c17_i32_99 dim 1 : vector<4x256xf32>, i32 -> vector<4x256xf32>
    %201 = vector.broadcast %199 : vector<1x256xf32> to vector<4x256xf32>
    %202 = arith.mulf %200, %201 : vector<4x256xf32>
    %203 = arith.truncf %202 : vector<4x256xf32> to vector<4x256xbf16>
    %c24_100 = arith.constant 24 : index
    %c0_101 = arith.constant 0 : index
    %204 = vector.load %arg7[%c24_100, %c0_101] : memref<100x256xbf16, #tpu.memory_space<vmem>>, vector<4x256xbf16>
    tpu.vector_store %arg7[%c24_100, %c0_101], %203 {strides = array<i32>} : memref<100x256xbf16, #tpu.memory_space<vmem>>, vector<4x256xbf16>,
    %c7_102 = arith.constant 7 : index
    %c0_103 = arith.constant 0 : index
    %205 = vector.load %arg2[%c7_102, %c0_103] : memref<25x256xf32, #tpu.memory_space<vmem>>, vector<1x256xf32>
    %c16_i32_104 = arith.constant 16 : i32
    %206 = tpu.dynamic_rotate %162 by %c16_i32_104 dim 1 : vector<4x256xf32>, i32 -> vector<4x256xf32>
    %207 = vector.broadcast %205 : vector<1x256xf32> to vector<4x256xf32>
    %208 = arith.mulf %206, %207 : vector<4x256xf32>
    %209 = arith.truncf %208 : vector<4x256xf32> to vector<4x256xbf16>
    %c28_105 = arith.constant 28 : index
    %c0_106 = arith.constant 0 : index
    %210 = vector.load %arg7[%c28_105, %c0_106] : memref<100x256xbf16, #tpu.memory_space<vmem>>, vector<4x256xbf16>
    tpu.vector_store %arg7[%c28_105, %c0_106], %209 {strides = array<i32>} : memref<100x256xbf16, #tpu.memory_space<vmem>>, vector<4x256xbf16>,
    %c8_107 = arith.constant 8 : index
    %c0_108 = arith.constant 0 : index
    %211 = vector.load %arg2[%c8_107, %c0_108] : memref<25x256xf32, #tpu.memory_space<vmem>>, vector<1x256xf32>
    %c15_i32_109 = arith.constant 15 : i32
    %212 = tpu.dynamic_rotate %162 by %c15_i32_109 dim 1 : vector<4x256xf32>, i32 -> vector<4x256xf32>
    %213 = vector.broadcast %211 : vector<1x256xf32> to vector<4x256xf32>
    %214 = arith.mulf %212, %213 : vector<4x256xf32>
    %215 = arith.truncf %214 : vector<4x256xf32> to vector<4x256xbf16>
    %c32_110 = arith.constant 32 : index
    %c0_111 = arith.constant 0 : index
    %216 = vector.load %arg7[%c32_110, %c0_111] : memref<100x256xbf16, #tpu.memory_space<vmem>>, vector<4x256xbf16>
    tpu.vector_store %arg7[%c32_110, %c0_111], %215 {strides = array<i32>} : memref<100x256xbf16, #tpu.memory_space<vmem>>, vector<4x256xbf16>,
    %c9_112 = arith.constant 9 : index
    %c0_113 = arith.constant 0 : index
    %217 = vector.load %arg2[%c9_112, %c0_113] : memref<25x256xf32, #tpu.memory_space<vmem>>, vector<1x256xf32>
    %c14_i32_114 = arith.constant 14 : i32
    %218 = tpu.dynamic_rotate %162 by %c14_i32_114 dim 1 : vector<4x256xf32>, i32 -> vector<4x256xf32>
    %219 = vector.broadcast %217 : vector<1x256xf32> to vector<4x256xf32>
    %220 = arith.mulf %218, %219 : vector<4x256xf32>
    %221 = arith.truncf %220 : vector<4x256xf32> to vector<4x256xbf16>
    %c36_115 = arith.constant 36 : index
    %c0_116 = arith.constant 0 : index
    %222 = vector.load %arg7[%c36_115, %c0_116] : memref<100x256xbf16, #tpu.memory_space<vmem>>, vector<4x256xbf16>
    tpu.vector_store %arg7[%c36_115, %c0_116], %221 {strides = array<i32>} : memref<100x256xbf16, #tpu.memory_space<vmem>>, vector<4x256xbf16>,
    %c10_117 = arith.constant 10 : index
    %c0_118 = arith.constant 0 : index
    %223 = vector.load %arg2[%c10_117, %c0_118] : memref<25x256xf32, #tpu.memory_space<vmem>>, vector<1x256xf32>
    %c2_i32_119 = arith.constant 2 : i32
    %224 = tpu.dynamic_rotate %162 by %c2_i32_119 dim 1 : vector<4x256xf32>, i32 -> vector<4x256xf32>
    %225 = vector.broadcast %223 : vector<1x256xf32> to vector<4x256xf32>
    %226 = arith.mulf %224, %225 : vector<4x256xf32>
    %227 = arith.truncf %226 : vector<4x256xf32> to vector<4x256xbf16>
    %c40_120 = arith.constant 40 : index
    %c0_121 = arith.constant 0 : index
    %228 = vector.load %arg7[%c40_120, %c0_121] : memref<100x256xbf16, #tpu.memory_space<vmem>>, vector<4x256xbf16>
    tpu.vector_store %arg7[%c40_120, %c0_121], %227 {strides = array<i32>} : memref<100x256xbf16, #tpu.memory_space<vmem>>, vector<4x256xbf16>,
    %c11_122 = arith.constant 11 : index
    %c0_123 = arith.constant 0 : index
    %229 = vector.load %arg2[%c11_122, %c0_123] : memref<25x256xf32, #tpu.memory_space<vmem>>, vector<1x256xf32>
    %c1_i32_124 = arith.constant 1 : i32
    %230 = tpu.dynamic_rotate %162 by %c1_i32_124 dim 1 : vector<4x256xf32>, i32 -> vector<4x256xf32>
    %231 = vector.broadcast %229 : vector<1x256xf32> to vector<4x256xf32>
    %232 = arith.mulf %230, %231 : vector<4x256xf32>
    %233 = arith.truncf %232 : vector<4x256xf32> to vector<4x256xbf16>
    %c44_125 = arith.constant 44 : index
    %c0_126 = arith.constant 0 : index
    %234 = vector.load %arg7[%c44_125, %c0_126] : memref<100x256xbf16, #tpu.memory_space<vmem>>, vector<4x256xbf16>
    tpu.vector_store %arg7[%c44_125, %c0_126], %233 {strides = array<i32>} : memref<100x256xbf16, #tpu.memory_space<vmem>>, vector<4x256xbf16>,
    %c12_127 = arith.constant 12 : index
    %c0_128 = arith.constant 0 : index
    %235 = vector.load %arg2[%c12_127, %c0_128] : memref<25x256xf32, #tpu.memory_space<vmem>>, vector<1x256xf32>
    %236 = vector.broadcast %235 : vector<1x256xf32> to vector<4x256xf32>
    %237 = arith.mulf %162, %236 : vector<4x256xf32>
    %238 = arith.truncf %237 : vector<4x256xf32> to vector<4x256xbf16>
    %c48_129 = arith.constant 48 : index
    %c0_130 = arith.constant 0 : index
    %239 = vector.load %arg7[%c48_129, %c0_130] : memref<100x256xbf16, #tpu.memory_space<vmem>>, vector<4x256xbf16>
    tpu.vector_store %arg7[%c48_129, %c0_130], %238 {strides = array<i32>} : memref<100x256xbf16, #tpu.memory_space<vmem>>, vector<4x256xbf16>,
    %c13_131 = arith.constant 13 : index
    %c0_132 = arith.constant 0 : index
    %240 = vector.load %arg2[%c13_131, %c0_132] : memref<25x256xf32, #tpu.memory_space<vmem>>, vector<1x256xf32>
    %c255_i32_133 = arith.constant 255 : i32
    %241 = tpu.dynamic_rotate %162 by %c255_i32_133 dim 1 : vector<4x256xf32>, i32 -> vector<4x256xf32>
    %242 = vector.broadcast %240 : vector<1x256xf32> to vector<4x256xf32>
    %243 = arith.mulf %241, %242 : vector<4x256xf32>
    %244 = arith.truncf %243 : vector<4x256xf32> to vector<4x256xbf16>
    %c52_134 = arith.constant 52 : index
    %c0_135 = arith.constant 0 : index
    %245 = vector.load %arg7[%c52_134, %c0_135] : memref<100x256xbf16, #tpu.memory_space<vmem>>, vector<4x256xbf16>
    tpu.vector_store %arg7[%c52_134, %c0_135], %244 {strides = array<i32>} : memref<100x256xbf16, #tpu.memory_space<vmem>>, vector<4x256xbf16>,
    %c14_136 = arith.constant 14 : index
    %c0_137 = arith.constant 0 : index
    %246 = vector.load %arg2[%c14_136, %c0_137] : memref<25x256xf32, #tpu.memory_space<vmem>>, vector<1x256xf32>
    %c254_i32_138 = arith.constant 254 : i32
    %247 = tpu.dynamic_rotate %162 by %c254_i32_138 dim 1 : vector<4x256xf32>, i32 -> vector<4x256xf32>
    %248 = vector.broadcast %246 : vector<1x256xf32> to vector<4x256xf32>
    %249 = arith.mulf %247, %248 : vector<4x256xf32>
    %250 = arith.truncf %249 : vector<4x256xf32> to vector<4x256xbf16>
    %c56_139 = arith.constant 56 : index
    %c0_140 = arith.constant 0 : index
    %251 = vector.load %arg7[%c56_139, %c0_140] : memref<100x256xbf16, #tpu.memory_space<vmem>>, vector<4x256xbf16>
    tpu.vector_store %arg7[%c56_139, %c0_140], %250 {strides = array<i32>} : memref<100x256xbf16, #tpu.memory_space<vmem>>, vector<4x256xbf16>,
    %c15_141 = arith.constant 15 : index
    %c0_142 = arith.constant 0 : index
    %252 = vector.load %arg2[%c15_141, %c0_142] : memref<25x256xf32, #tpu.memory_space<vmem>>, vector<1x256xf32>
    %c242_i32_143 = arith.constant 242 : i32
    %253 = tpu.dynamic_rotate %162 by %c242_i32_143 dim 1 : vector<4x256xf32>, i32 -> vector<4x256xf32>
    %254 = vector.broadcast %252 : vector<1x256xf32> to vector<4x256xf32>
    %255 = arith.mulf %253, %254 : vector<4x256xf32>
    %256 = arith.truncf %255 : vector<4x256xf32> to vector<4x256xbf16>
    %c60_144 = arith.constant 60 : index
    %c0_145 = arith.constant 0 : index
    %257 = vector.load %arg7[%c60_144, %c0_145] : memref<100x256xbf16, #tpu.memory_space<vmem>>, vector<4x256xbf16>
    tpu.vector_store %arg7[%c60_144, %c0_145], %256 {strides = array<i32>} : memref<100x256xbf16, #tpu.memory_space<vmem>>, vector<4x256xbf16>,
    %c16_146 = arith.constant 16 : index
    %c0_147 = arith.constant 0 : index
    %258 = vector.load %arg2[%c16_146, %c0_147] : memref<25x256xf32, #tpu.memory_space<vmem>>, vector<1x256xf32>
    %c241_i32_148 = arith.constant 241 : i32
    %259 = tpu.dynamic_rotate %162 by %c241_i32_148 dim 1 : vector<4x256xf32>, i32 -> vector<4x256xf32>
    %260 = vector.broadcast %258 : vector<1x256xf32> to vector<4x256xf32>
    %261 = arith.mulf %259, %260 : vector<4x256xf32>
    %262 = arith.truncf %261 : vector<4x256xf32> to vector<4x256xbf16>
    %c64_149 = arith.constant 64 : index
    %c0_150 = arith.constant 0 : index
    %263 = vector.load %arg7[%c64_149, %c0_150] : memref<100x256xbf16, #tpu.memory_space<vmem>>, vector<4x256xbf16>
    tpu.vector_store %arg7[%c64_149, %c0_150], %262 {strides = array<i32>} : memref<100x256xbf16, #tpu.memory_space<vmem>>, vector<4x256xbf16>,
    %c17_151 = arith.constant 17 : index
    %c0_152 = arith.constant 0 : index
    %264 = vector.load %arg2[%c17_151, %c0_152] : memref<25x256xf32, #tpu.memory_space<vmem>>, vector<1x256xf32>
    %c240_i32_153 = arith.constant 240 : i32
    %265 = tpu.dynamic_rotate %162 by %c240_i32_153 dim 1 : vector<4x256xf32>, i32 -> vector<4x256xf32>
    %266 = vector.broadcast %264 : vector<1x256xf32> to vector<4x256xf32>
    %267 = arith.mulf %265, %266 : vector<4x256xf32>
    %268 = arith.truncf %267 : vector<4x256xf32> to vector<4x256xbf16>
    %c68_154 = arith.constant 68 : index
    %c0_155 = arith.constant 0 : index
    %269 = vector.load %arg7[%c68_154, %c0_155] : memref<100x256xbf16, #tpu.memory_space<vmem>>, vector<4x256xbf16>
    tpu.vector_store %arg7[%c68_154, %c0_155], %268 {strides = array<i32>} : memref<100x256xbf16, #tpu.memory_space<vmem>>, vector<4x256xbf16>,
    %c18_156 = arith.constant 18 : index
    %c0_157 = arith.constant 0 : index
    %270 = vector.load %arg2[%c18_156, %c0_157] : memref<25x256xf32, #tpu.memory_space<vmem>>, vector<1x256xf32>
    %c239_i32_158 = arith.constant 239 : i32
    %271 = tpu.dynamic_rotate %162 by %c239_i32_158 dim 1 : vector<4x256xf32>, i32 -> vector<4x256xf32>
    %272 = vector.broadcast %270 : vector<1x256xf32> to vector<4x256xf32>
    %273 = arith.mulf %271, %272 : vector<4x256xf32>
    %274 = arith.truncf %273 : vector<4x256xf32> to vector<4x256xbf16>
    %c72_159 = arith.constant 72 : index
    %c0_160 = arith.constant 0 : index
    %275 = vector.load %arg7[%c72_159, %c0_160] : memref<100x256xbf16, #tpu.memory_space<vmem>>, vector<4x256xbf16>
    tpu.vector_store %arg7[%c72_159, %c0_160], %274 {strides = array<i32>} : memref<100x256xbf16, #tpu.memory_space<vmem>>, vector<4x256xbf16>,
    %c19_161 = arith.constant 19 : index
    %c0_162 = arith.constant 0 : index
    %276 = vector.load %arg2[%c19_161, %c0_162] : memref<25x256xf32, #tpu.memory_space<vmem>>, vector<1x256xf32>
    %c238_i32_163 = arith.constant 238 : i32
    %277 = tpu.dynamic_rotate %162 by %c238_i32_163 dim 1 : vector<4x256xf32>, i32 -> vector<4x256xf32>
    %278 = vector.broadcast %276 : vector<1x256xf32> to vector<4x256xf32>
    %279 = arith.mulf %277, %278 : vector<4x256xf32>
    %280 = arith.truncf %279 : vector<4x256xf32> to vector<4x256xbf16>
    %c76_164 = arith.constant 76 : index
    %c0_165 = arith.constant 0 : index
    %281 = vector.load %arg7[%c76_164, %c0_165] : memref<100x256xbf16, #tpu.memory_space<vmem>>, vector<4x256xbf16>
    tpu.vector_store %arg7[%c76_164, %c0_165], %280 {strides = array<i32>} : memref<100x256xbf16, #tpu.memory_space<vmem>>, vector<4x256xbf16>,
    %c20_166 = arith.constant 20 : index
    %c0_167 = arith.constant 0 : index
    %282 = vector.load %arg2[%c20_166, %c0_167] : memref<25x256xf32, #tpu.memory_space<vmem>>, vector<1x256xf32>
    %c226_i32_168 = arith.constant 226 : i32
    %283 = tpu.dynamic_rotate %162 by %c226_i32_168 dim 1 : vector<4x256xf32>, i32 -> vector<4x256xf32>
    %284 = vector.broadcast %282 : vector<1x256xf32> to vector<4x256xf32>
    %285 = arith.mulf %283, %284 : vector<4x256xf32>
    %286 = arith.truncf %285 : vector<4x256xf32> to vector<4x256xbf16>
    %c80_169 = arith.constant 80 : index
    %c0_170 = arith.constant 0 : index
    %287 = vector.load %arg7[%c80_169, %c0_170] : memref<100x256xbf16, #tpu.memory_space<vmem>>, vector<4x256xbf16>
    tpu.vector_store %arg7[%c80_169, %c0_170], %286 {strides = array<i32>} : memref<100x256xbf16, #tpu.memory_space<vmem>>, vector<4x256xbf16>,
    %c21_171 = arith.constant 21 : index
    %c0_172 = arith.constant 0 : index
    %288 = vector.load %arg2[%c21_171, %c0_172] : memref<25x256xf32, #tpu.memory_space<vmem>>, vector<1x256xf32>
    %c225_i32_173 = arith.constant 225 : i32
    %289 = tpu.dynamic_rotate %162 by %c225_i32_173 dim 1 : vector<4x256xf32>, i32 -> vector<4x256xf32>
    %290 = vector.broadcast %288 : vector<1x256xf32> to vector<4x256xf32>
    %291 = arith.mulf %289, %290 : vector<4x256xf32>
    %292 = arith.truncf %291 : vector<4x256xf32> to vector<4x256xbf16>
    %c84_174 = arith.constant 84 : index
    %c0_175 = arith.constant 0 : index
    %293 = vector.load %arg7[%c84_174, %c0_175] : memref<100x256xbf16, #tpu.memory_space<vmem>>, vector<4x256xbf16>
    tpu.vector_store %arg7[%c84_174, %c0_175], %292 {strides = array<i32>} : memref<100x256xbf16, #tpu.memory_space<vmem>>, vector<4x256xbf16>,
    %c22_176 = arith.constant 22 : index
    %c0_177 = arith.constant 0 : index
    %294 = vector.load %arg2[%c22_176, %c0_177] : memref<25x256xf32, #tpu.memory_space<vmem>>, vector<1x256xf32>
    %c224_i32_178 = arith.constant 224 : i32
    %295 = tpu.dynamic_rotate %162 by %c224_i32_178 dim 1 : vector<4x256xf32>, i32 -> vector<4x256xf32>
    %296 = vector.broadcast %294 : vector<1x256xf32> to vector<4x256xf32>
    %297 = arith.mulf %295, %296 : vector<4x256xf32>
    %298 = arith.truncf %297 : vector<4x256xf32> to vector<4x256xbf16>
    %c88_179 = arith.constant 88 : index
    %c0_180 = arith.constant 0 : index
    %299 = vector.load %arg7[%c88_179, %c0_180] : memref<100x256xbf16, #tpu.memory_space<vmem>>, vector<4x256xbf16>
    tpu.vector_store %arg7[%c88_179, %c0_180], %298 {strides = array<i32>} : memref<100x256xbf16, #tpu.memory_space<vmem>>, vector<4x256xbf16>,
    %c23_181 = arith.constant 23 : index
    %c0_182 = arith.constant 0 : index
    %300 = vector.load %arg2[%c23_181, %c0_182] : memref<25x256xf32, #tpu.memory_space<vmem>>, vector<1x256xf32>
    %c223_i32_183 = arith.constant 223 : i32
    %301 = tpu.dynamic_rotate %162 by %c223_i32_183 dim 1 : vector<4x256xf32>, i32 -> vector<4x256xf32>
    %302 = vector.broadcast %300 : vector<1x256xf32> to vector<4x256xf32>
    %303 = arith.mulf %301, %302 : vector<4x256xf32>
    %304 = arith.truncf %303 : vector<4x256xf32> to vector<4x256xbf16>
    %c92_184 = arith.constant 92 : index
    %c0_185 = arith.constant 0 : index
    %305 = vector.load %arg7[%c92_184, %c0_185] : memref<100x256xbf16, #tpu.memory_space<vmem>>, vector<4x256xbf16>
    tpu.vector_store %arg7[%c92_184, %c0_185], %304 {strides = array<i32>} : memref<100x256xbf16, #tpu.memory_space<vmem>>, vector<4x256xbf16>,
    %c24_186 = arith.constant 24 : index
    %c0_187 = arith.constant 0 : index
    %306 = vector.load %arg2[%c24_186, %c0_187] : memref<25x256xf32, #tpu.memory_space<vmem>>, vector<1x256xf32>
    %c222_i32_188 = arith.constant 222 : i32
    %307 = tpu.dynamic_rotate %162 by %c222_i32_188 dim 1 : vector<4x256xf32>, i32 -> vector<4x256xf32>
    %308 = vector.broadcast %306 : vector<1x256xf32> to vector<4x256xf32>
    %309 = arith.mulf %307, %308 : vector<4x256xf32>
    %310 = arith.truncf %309 : vector<4x256xf32> to vector<4x256xbf16>
    %c96_189 = arith.constant 96 : index
    %c0_190 = arith.constant 0 : index
    %311 = vector.load %arg7[%c96_189, %c0_190] : memref<100x256xbf16, #tpu.memory_space<vmem>>, vector<4x256xbf16>
    tpu.vector_store %arg7[%c96_189, %c0_190], %310 {strides = array<i32>} : memref<100x256xbf16, #tpu.memory_space<vmem>>, vector<4x256xbf16>,
    %c0_191 = arith.constant 0 : index
    %c0_192 = arith.constant 0 : index
    %312 = vector.load %arg4[%c0_191, %c0_192] : memref<4x100xbf16, #tpu.memory_space<vmem>>, vector<4x100xbf16>
    %c0_193 = arith.constant 0 : index
    %c0_194 = arith.constant 0 : index
    %313 = vector.load %arg7[%c0_193, %c0_194] : memref<100x256xbf16, #tpu.memory_space<vmem>>, vector<100x256xbf16>
    %cst_195 = arith.constant dense<0.000000e+00> : vector<4x256xf32>
    %314 = tpu.matmul %312, %313, %cst_195 {dimension_numbers = #tpu.dot_dimension_numbers<[1], [0], [0], [1], [0, 0, 1, 1], [], []>} : vector<4x100xbf16>, vector<100x256xbf16>, vector<4x256xf32> -> vector<4x256xf32>
    %315 = vector.extract_strided_slice %0 {offsets = [0, 2], sizes = [4, 1], strides = [1, 1]} : vector<4x4xf32> to vector<4x1xf32>
    %316 = vector.broadcast %315 : vector<4x1xf32> to vector<4x256xf32>
    %317 = arith.mulf %314, %316 : vector<4x256xf32>
    %318 = vector.extract_strided_slice %0 {offsets = [0, 3], sizes = [4, 1], strides = [1, 1]} : vector<4x4xf32> to vector<4x1xf32>
    %319 = vector.broadcast %318 : vector<4x1xf32> to vector<4x256xf32>
    %320 = arith.addf %317, %319 : vector<4x256xf32>
    %321 = arith.addf %320, %2 : vector<4x256xf32>
    %cst_196 = arith.constant 0.000000e+00 : f32
    %322 = vector.broadcast %cst_196 : f32 to vector<4x256xf32>
    %323 = arith.maximumf %321, %322 : vector<4x256xf32>
    %c0_197 = arith.constant 0 : index
    %c0_198 = arith.constant 0 : index
    %c0_199 = arith.constant 0 : index
    %324 = vector.load %arg6[%c0_197, %c0_198, %c0_199] : memref<1x4x256xf32, #tpu.memory_space<vmem>>, vector<1x4x256xf32>
    %325 = vector.shape_cast %324 : vector<1x4x256xf32> to vector<4x256xf32>
    %326 = vector.shape_cast %323 : vector<4x256xf32> to vector<1x4x256xf32>
    tpu.vector_store %arg6[%c0_197, %c0_198, %c0_199], %326 {strides = array<i32>} : memref<1x4x256xf32, #tpu.memory_space<vmem>>, vector<1x4x256xf32>,
    return
  }
  func.func @transform_0(%arg0: i32) -> (i32, i32, i32) {
    %c0_i32 = arith.constant 0 : i32
    %c0_i32_0 = arith.constant 0 : i32
    %c0_i32_1 = arith.constant 0 : i32
    return %arg0, %c0_i32, %c0_i32_0 : i32, i32, i32
  }
  func.func @transform_1(%arg0: i32) -> (i32, i32) {
    %c0_i32 = arith.constant 0 : i32
    %c0_i32_0 = arith.constant 0 : i32
    %c0_i32_1 = arith.constant 0 : i32
    return %c0_i32, %c0_i32_0 : i32, i32
  }
  func.func @transform_2(%arg0: i32) -> (i32, i32) {
    %c0_i32 = arith.constant 0 : i32
    %c0_i32_0 = arith.constant 0 : i32
    %c0_i32_1 = arith.constant 0 : i32
    return %c0_i32, %c0_i32_0 : i32, i32
  }
  func.func @transform_3(%arg0: i32) -> (i32, i32) {
    %c0_i32 = arith.constant 0 : i32
    %c0_i32_0 = arith.constant 0 : i32
    %c0_i32_1 = arith.constant 0 : i32
    return %c0_i32, %c0_i32_0 : i32, i32
  }
  func.func @transform_4(%arg0: i32) -> (i32, i32) {
    %c0_i32 = arith.constant 0 : i32
    %c0_i32_0 = arith.constant 0 : i32
    %c0_i32_1 = arith.constant 0 : i32
    return %c0_i32, %c0_i32_0 : i32, i32
  }
  func.func @transform_5(%arg0: i32) -> (i32, i32, i32) {
    %c0_i32 = arith.constant 0 : i32
    %c0_i32_0 = arith.constant 0 : i32
    %c0_i32_1 = arith.constant 0 : i32
    return %arg0, %c0_i32, %c0_i32_0 : i32, i32, i32
  }
}

</mosaic_0001>

<llo_original>
// kernel: tpu_custom_call.1
$region0: #{tpu_custom_call.1}
  #allocation0 [shape = 'u32[]', space=smem, size = 0x4, offset = 0x4, fixed_abs, tag = 'smem constant byte address 0x4 - core index']
  #allocation1 [shape = 'u32[144,128]{1,0:T(1,128)}', space=vmem, size = 0x12000, scoped, tag = 'internal scratch']
  #allocation2 [shape = 'bf16[100,256]{1,0:T(8,128)(2,1)}', space=vmem, size = 0xd000, scoped, tag = 'scratch operand']
  %s0 = inlined_call_operand.hbm [shape: f32[2,4,256], index: 0, kind: input, shape index: {}]
  %s1 = inlined_call_operand.hbm [shape: f32[25,256], index: 1, kind: input, shape index: {}]
  %s2 = inlined_call_operand.vmem [shape: bf16[4,100], index: 2, kind: input, shape index: {}]
  %s3 = inlined_call_operand.hbm [shape: bf16[4,100], index: 3, kind: input, shape index: {}]
  %s4 = inlined_call_operand.vmem [shape: f32[4,4], index: 4, kind: input, shape index: {}]
  %s5 = inlined_call_operand.hbm [shape: f32[2,4,256], index: 5, kind: output, shape index: {}]
  %s6 = sld [smem:[#allocation0]]
  $region65: #{tpu_custom_call.1} parent=0
    _
  %s8 = ssub.s32 1, %s6
  %s9 = scalar_select 0, %s8, %s6
  $region1: #{tpu_custom_call.1} parent=0
    #allocation3 [shape = 'u8[8192]{0}', space=vmem, size = 0x2000, scoped, tag = 'input window, operand 0']
    #allocation4 [shape = 's32[2]{0}', space=sflag, size = 0x8, scoped, tag = 'scoped memory for tpu_custom_call.1']
    #allocation5 [shape = 's32[2]{0}', space=sflag, size = 0x8, scoped, tag = 'scoped memory for tpu_custom_call.1']
    #allocation6 [shape = 'u8[32768]{0}', space=vmem, size = 0x8000, scoped, tag = 'input window, operand 1, single buffered']
    #allocation7 [shape = 's32[1]{0}', space=sflag, size = 0x4, scoped, tag = 'scoped memory for tpu_custom_call.1']
    #allocation8 [shape = 'u8[1024]{0}', space=vmem, size = 0x400, scoped, tag = 'input window, operand 3, single buffered']
    #allocation9 [shape = 'u8[8192]{0}', space=vmem, size = 0x2000, scoped, tag = 'output window, operand 0']
    %10 = vsyncpa [#allocation4], 0
    %s11 = scalar_lea.sflag [#allocation4], 1
    %12 = vsyncpa %s11, 0
    %13 = vsyncpa [#allocation7], 0
    %14 = vsyncpa [#allocation5], 0
    %s15 = scalar_lea.sflag [#allocation5], 1
    %16 = vsyncpa %s15, 0
    loop: start=0, step=1, limit=4
    $region2: #{tpu_custom_call.1} parent=1 // loop_pre_header
      _
    $region3: #{tpu_custom_call.1} parent=1 // loop_header
      %s18 = sphi 0, %s22
      %p19 = scmp.ge.s32.totalorder %s18, 4
      %s28 = sphi 0, %s30
      %s31 = sphi 0, %s28
      %s32 = sphi 0, %s31
      %s48 = sphi 0, %s32
      %s52 = sphi 0, %s52
      %s54 = sphi 0, %s52
      %s55 = sphi 0, %s54
      %s69 = sphi 0, %s55
      %s73 = sphi 0, %s73
      %s75 = sphi 0, %s73
      %s76 = sphi 0, %s75
      %s90 = sphi 0, %s76
      %s94 = sphi 0, %s94
      %s96 = sphi 0, %s94
      %s97 = sphi 0, %s96
      %s111 = sphi 0, %s97
      %s115 = sphi 0, %s115
      %s117 = sphi 0, %s115
      %s118 = sphi 0, %s117
      %s132 = sphi 0, %s118
      %s138 = sphi 0, %s140
      %s141 = sphi 0, %s138
      %s142 = sphi 0, %s141
      %s158 = sphi 0, %s142
    $region4: #{tpu_custom_call.1} parent=1 // loop_header_branch
      %21 = sbr.rel (%p19) target = $region8
    $region5: #{tpu_custom_call.1} parent=1 // loop_body
      %s23 = ssub.s32 %s18, 1
      %s24 = ssub.s32 %s18, 2
      %s25 = sadd.s32 %s18, 1
      %s26 = ssub.s32 %s18, %s25
      %p27 = scmp.eq.s32.totalorder %s26, 0
      %s29 = sadd.s32 %s28, 1
      %s30 = scalar_select %p27, %s28, %s29
      %p33 = pneg %p27
      %p34 = scmp.eq.s32.totalorder %s18, 1
      %p35 = por %p33, %p34
      %p36 = scmp.ne.s32.totalorder %s28, %s31
      %p37 = scmp.eq.s32.totalorder %s18, 0
      %p38 = por %p36, %p37
      %p39 = scmp.ne.s32.totalorder %s28, %s31
      %p40 = scmp.eq.s32.totalorder %s23, 1
      %p41 = por %p39, %p40
      %p42 = scmp.ne.s32.totalorder %s31, %s32
      %p43 = scmp.eq.s32.totalorder %s23, 0
      %p44 = por %p42, %p43
      %p45 = scmp.ne.s32.totalorder %s31, %s32
      %p46 = scmp.eq.s32.totalorder %s24, 1
      %p47 = por %p45, %p46
      %p49 = scmp.ne.s32.totalorder %s32, %s48
      %p50 = scmp.eq.s32.totalorder %s24, 0
      %p51 = por %p49, %p50
      %s53 = sadd.s32 %s52, 1
      %p56 = scmp.eq.s32.totalorder %s18, 1
      %p57 = scmp.ne.s32.totalorder %s52, %s54
      %p58 = scmp.eq.s32.totalorder %s18, 0
      %p59 = por %p57, %p58
      %p60 = scmp.ne.s32.totalorder %s52, %s54
      %p61 = scmp.eq.s32.totalorder %s23, 1
      %p62 = por %p60, %p61
      %p63 = scmp.ne.s32.totalorder %s54, %s55
      %p64 = scmp.eq.s32.totalorder %s23, 0
      %p65 = por %p63, %p64
      %p66 = scmp.ne.s32.totalorder %s54, %s55
      %p67 = scmp.eq.s32.totalorder %s24, 1
      %p68 = por %p66, %p67
      %p70 = scmp.ne.s32.totalorder %s55, %s69
      %p71 = scmp.eq.s32.totalorder %s24, 0
      %p72 = por %p70, %p71
      %s74 = sadd.s32 %s73, 1
      %p77 = scmp.eq.s32.totalorder %s18, 1
      %p78 = scmp.ne.s32.totalorder %s73, %s75
      %p79 = scmp.eq.s32.totalorder %s18, 0
      %p80 = por %p78, %p79
      %p81 = scmp.ne.s32.totalorder %s73, %s75
      %p82 = scmp.eq.s32.totalorder %s23, 1
      %p83 = por %p81, %p82
      %p84 = scmp.ne.s32.totalorder %s75, %s76
      %p85 = scmp.eq.s32.totalorder %s23, 0
      %p86 = por %p84, %p85
      %p87 = scmp.ne.s32.totalorder %s75, %s76
      %p88 = scmp.eq.s32.totalorder %s24, 1
      %p89 = por %p87, %p88
      %p91 = scmp.ne.s32.totalorder %s76, %s90
      %p92 = scmp.eq.s32.totalorder %s24, 0
      %p93 = por %p91, %p92
      %s95 = sadd.s32 %s94, 1
      %p98 = scmp.eq.s32.totalorder %s18, 1
      %p99 = scmp.ne.s32.totalorder %s94, %s96
      %p100 = scmp.eq.s32.totalorder %s18, 0
      %p101 = por %p99, %p100
      %p102 = scmp.ne.s32.totalorder %s94, %s96
      %p103 = scmp.eq.s32.totalorder %s23, 1
      %p104 = por %p102, %p103
      %p105 = scmp.ne.s32.totalorder %s96, %s97
      %p106 = scmp.eq.s32.totalorder %s23, 0
      %p107 = por %p105, %p106
      %p108 = scmp.ne.s32.totalorder %s96, %s97
      %p109 = scmp.eq.s32.totalorder %s24, 1
      %p110 = por %p108, %p109
      %p112 = scmp.ne.s32.totalorder %s97, %s111
      %p113 = scmp.eq.s32.totalorder %s24, 0
      %p114 = por %p112, %p113
      %s116 = sadd.s32 %s115, 1
      %p119 = scmp.eq.s32.totalorder %s18, 1
      %p120 = scmp.ne.s32.totalorder %s115, %s117
      %p121 = scmp.eq.s32.totalorder %s18, 0
      %p122 = por %p120, %p121
      %p123 = scmp.ne.s32.totalorder %s115, %s117
      %p124 = scmp.eq.s32.totalorder %s23, 1
      %p125 = por %p123, %p124
      %p126 = scmp.ne.s32.totalorder %s117, %s118
      %p127 = scmp.eq.s32.totalorder %s23, 0
      %p128 = por %p126, %p127
      %p129 = scmp.ne.s32.totalorder %s117, %s118
      %p130 = scmp.eq.s32.totalorder %s24, 1
      %p131 = por %p129, %p130
      %p133 = scmp.ne.s32.totalorder %s118, %s132
      %p134 = scmp.eq.s32.totalorder %s24, 0
      %p135 = por %p133, %p134
      %s136 = ssub.s32 %s18, %s25
      %p137 = scmp.eq.s32.totalorder %s136, 0
      %s139 = sadd.s32 %s138, 1
      %s140 = scalar_select %p137, %s138, %s139
      %p143 = pneg %p137
      %p144 = scmp.eq.s32.totalorder %s18, 1
      %p145 = por %p143, %p144
      %p146 = scmp.ne.s32.totalorder %s138, %s141
      %p147 = scmp.eq.s32.totalorder %s18, 0
      %p148 = por %p146, %p147
      %p149 = scmp.ne.s32.totalorder %s138, %s141
      %p150 = scmp.eq.s32.totalorder %s23, 1
      %p151 = por %p149, %p150
      %p152 = scmp.ne.s32.totalorder %s141, %s142
      %p153 = scmp.eq.s32.totalorder %s23, 0
      %p154 = por %p152, %p153
      %p155 = scmp.ne.s32.totalorder %s141, %s142
      %p156 = scmp.eq.s32.totalorder %s24, 1
      %p157 = por %p155, %p156
      %p159 = scmp.ne.s32.totalorder %s142, %s158
      %p160 = scmp.eq.s32.totalorder %s24, 0
      %p161 = por %p159, %p160
      %p162 = scmp.le.s32.totalorder 1, %s18
      %p163 = scmp.lt.s32.totalorder %s18, 3
      %p164 = pnand %p162, %p163
      %p165 = pneg %p164
      // Predicated region
      $region9: #{tpu_custom_call.1} parent=5 // pred_check
        _
      $region10: #{tpu_custom_call.1} parent=5 // pred_check_branch
        %167 = sbr.rel (%p164) target = $region12
      $region11: #{tpu_custom_call.1} parent=5 // pred_region
        %s168 = ssub.s32 %s18, 1
        // Predicated region
        $region13: #{tpu_custom_call.1} parent=11 // pred_check
          %p169 = pneg %p65
        $region14: #{tpu_custom_call.1} parent=11 // pred_check_branch
          %171 = sbr.rel (%p169) target = $region16
        $region15: #{tpu_custom_call.1} parent=11 // pred_region
          %s173 = ssub.s32 1024, 1024
          %174 = vsyncadd [#allocation7], %s173
          %s175 = sshll.u32 [#allocation6], 4
          %s176 = int_to_ptr.vmem [resolvable:$true] %s175
          %181 = dma.hbm_to_vmem [thread:$0]  %s1, 1024, %s176, [#allocation7], 256, 256, 16
        $region16: #{tpu_custom_call.1} parent=11 // pred_fallthru
          _
        // Predicated region
        $region17: #{tpu_custom_call.1} parent=11 // pred_check
          %p182 = pneg %p86
        $region18: #{tpu_custom_call.1} parent=11 // pred_check_branch
          %184 = sbr.rel (%p182) target = $region20
        $region19: #{tpu_custom_call.1} parent=11 // pred_region
          _
        $region20: #{tpu_custom_call.1} parent=11 // pred_fallthru
          _
        // Predicated region
        $region21: #{tpu_custom_call.1} parent=11 // pred_check
          %p185 = pneg %p107
        $region22: #{tpu_custom_call.1} parent=11 // pred_check_branch
          %187 = sbr.rel (%p185) target = $region24
        $region23: #{tpu_custom_call.1} parent=11 // pred_region
          %s189 = ssub.s32 32, 32
          %190 = vsyncadd [#allocation7], %s189
          %s192 = sshll.u32 [#allocation8], 4
          %s193 = int_to_ptr.vmem [resolvable:$true] %s192
          %195 = dma.hbm_to_vmem [thread:$0]  %s3, 32, %s193, [#allocation7]
        $region24: #{tpu_custom_call.1} parent=11 // pred_fallthru
          _
        // Predicated region
        $region25: #{tpu_custom_call.1} parent=11 // pred_check
          %p196 = pneg %p128
        $region26: #{tpu_custom_call.1} parent=11 // pred_check_branch
          %198 = sbr.rel (%p196) target = $region28
        $region27: #{tpu_custom_call.1} parent=11 // pred_region
          _
        $region28: #{tpu_custom_call.1} parent=11 // pred_fallthru
          _
      $region12: #{tpu_custom_call.1} parent=5 // pred_fallthru
        _
      %p199 = scmp.lt.s32.totalorder %s18, 2
      // Predicated region
      $region29: #{tpu_custom_call.1} parent=5 // pred_check
        %p200 = pneg %p199
      $region30: #{tpu_custom_call.1} parent=5 // pred_check_branch
        %202 = sbr.rel (%p200) target = $region32
      $region31: #{tpu_custom_call.1} parent=5 // pred_region
        // Predicated region
        $region33: #{tpu_custom_call.1} parent=31 // pred_check
          %p203 = pneg %p38
        $region34: #{tpu_custom_call.1} parent=31 // pred_check_branch
          %205 = sbr.rel (%p203) target = $region36
        $region35: #{tpu_custom_call.1} parent=31 // pred_region
          %s206 = sand.u32 %s28, 1
          %s207 = scalar_lea.sflag [#allocation4], %s206
          %s208 = sand.u32 %s28, 1
          %s209 = smul.addr %s208, 8
          %s210 = scalar_lea.vmem [#allocation3], %s209
          %s212 = ssub.s32 128, 128
          %213 = vsyncadd %s207, %s212
          %s214 = smul.addr %s18, 2
          %s215 = smul.addr %s214, 64
          %s216 = scalar_lea.hbm %s0, %s215
          %s218 = sshll.u32 %s210, 4
          %s219 = int_to_ptr.vmem [resolvable:$true] %s218
          %221 = dma.hbm_to_vmem [thread:$0]  %s216, 128, %s219, %s207
        $region36: #{tpu_custom_call.1} parent=31 // pred_fallthru
          _
      $region32: #{tpu_custom_call.1} parent=5 // pred_fallthru
        _
      %p222 = scmp.le.s32.totalorder 1, %s18
      %p223 = scmp.lt.s32.totalorder %s18, 3
      %p224 = pnand %p222, %p223
      %p225 = pneg %p224
      // Predicated region
      $region37: #{tpu_custom_call.1} parent=5 // pred_check
        _
      $region38: #{tpu_custom_call.1} parent=5 // pred_check_branch
        %227 = sbr.rel (%p224) target = $region40
      $region39: #{tpu_custom_call.1} parent=5 // pred_region
        %s228 = ssub.s32 %s18, 1
        %s229 = sand.u32 %s31, 1
        %s230 = scalar_lea.sflag [#allocation4], %s229
        %s231 = sand.u32 %s31, 1
        %s232 = smul.addr %s231, 8
        %s233 = scalar_lea.vmem [#allocation3], %s232
        // Predicated region
        $region41: #{tpu_custom_call.1} parent=39 // pred_check
          %p234 = pneg %p44
        $region42: #{tpu_custom_call.1} parent=39 // pred_check_branch
          %236 = sbr.rel (%p234) target = $region44
        $region43: #{tpu_custom_call.1} parent=39 // pred_region
          %237 = dma.done %s230, 128
        $region44: #{tpu_custom_call.1} parent=39 // pred_fallthru
          _
        // Predicated region
        $region45: #{tpu_custom_call.1} parent=39 // pred_check
          %p238 = pneg %p65
        $region46: #{tpu_custom_call.1} parent=39 // pred_check_branch
          %240 = sbr.rel (%p238) target = $region48
        $region47: #{tpu_custom_call.1} parent=39 // pred_region
          %241 = dma.done [#allocation7], 1024
        $region48: #{tpu_custom_call.1} parent=39 // pred_fallthru
          _
        // Predicated region
        $region49: #{tpu_custom_call.1} parent=39 // pred_check
          %p242 = pneg %p107
        $region50: #{tpu_custom_call.1} parent=39 // pred_check_branch
          %244 = sbr.rel (%p242) target = $region52
        $region51: #{tpu_custom_call.1} parent=39 // pred_region
          %245 = dma.done [#allocation7], 32
        $region52: #{tpu_custom_call.1} parent=39 // pred_fallthru
          _
        %s246 = sand.u32 %s31, 1
        %s247 = scalar_lea.sflag [#allocation4], %s246
        %s248 = sand.u32 %s31, 1
        %s249 = smul.addr %s248, 8
        %s250 = scalar_lea.vmem [#allocation3], %s249
        %p251 = pneg %p44
        %p252 = pneg %p41
        %p253 = pneg %p65
        %p254 = pneg %p62
        %p255 = pneg %p86
        %p256 = pneg %p83
        %p257 = pneg %p107
        %p258 = pneg %p104
        %p259 = pneg %p128
        %p260 = pneg %p125
        %p261 = pneg %p154
        %p262 = pneg %p151
        %s263 = sand.u32 %s141, 1
        %s264 = scalar_lea.sflag [#allocation5], %s263
        %s265 = sand.u32 %s141, 1
        %s266 = smul.addr %s265, 8
        %s267 = scalar_lea.vmem [#allocation9], %s266
        %v269 = vld [vmem:[%s4] sm:$0xf]
        %v270 = vld [vmem:[%s233] sm:$0xff]
        %v271 = vld [vmem:[#allocation6] ss:$8 sm:$0x3]
        %v273 = vcombine.high %v270, %v270
        %275 = vrot.lane.b32.xlu0 %v270, 34
        %v276 = vpop.permute.xlu0 %275
        %277 = vrot.lane.b32.xlu0 %v273, 34
        %v278 = vpop.permute.xlu0 %277
        %v279 = vlaneseq
        %v280 = vand.u32 %v279, 127
        %vm281 = vcmp.lt.s32.totalorder %v280, 34
        %v282 = vsel %vm281, %v276, %v278
        %v283 = vsel %vm281, %v278, %v276
        %v285 = vlaneseq
        %v286 = vshrl.u32 %v285, 7
        %v287 = vsub.s32 0, %v286
        %v288 = vrot.slane %v271, %v287
        %v289 = vlaneseq
        %v290 = vshrl.u32 %v289, 7
        %v291 = vsub.s32 1, %v290
        %v292 = vrot.slane %v271, %v291
        %v295 = vmul.f32 %v283, %v288
        %v296 = vmul.f32 %v282, %v292
        %v297 = vpack.c.bf16 %v295, %v295
        %v298 = vpack.c.bf16 %v296, %v296
        %v301 = vunpack.c.l.b16 %v297
        %v302 = vunpack.c.l.b16 %v298
        %v303 = vpack.c.b16 %v302, %v301
        %305 = vst [vmem:[#allocation2] sm:$0x33] %v303
        %s306 = scalar_lea.vmem [#allocation6], 1
        %v307 = vld [vmem:[%s306] ss:$8 sm:$0x3]
        %308 = vrot.lane.b32.xlu0 %v270, 33
        %v309 = vpop.permute.xlu0 %308
        %310 = vrot.lane.b32.xlu0 %v273, 33
        %v311 = vpop.permute.xlu0 %310
        %vm312 = vcmp.lt.s32.totalorder %v280, 33
        %v313 = vsel %vm312, %v309, %v311
        %v314 = vsel %vm312, %v311, %v309
        %v316 = vlaneseq
        %v317 = vshrl.u32 %v316, 7
        %v318 = vsub.s32 0, %v317
        %v319 = vrot.slane %v307, %v318
        %v320 = vlaneseq
        %v321 = vshrl.u32 %v320, 7
        %v322 = vsub.s32 1, %v321
        %v323 = vrot.slane %v307, %v322
        %v326 = vmul.f32 %v314, %v319
        %v327 = vmul.f32 %v313, %v323
        %v328 = vpack.c.bf16 %v326, %v326
        %v329 = vpack.c.bf16 %v327, %v327
        %v332 = vunpack.c.l.b16 %v328
        %v333 = vunpack.c.l.b16 %v329
        %v334 = vpack.c.b16 %v333, %v332
        %v335 = vrot.slane %v334, 6
        %337 = vst [vmem:[#allocation2] sm:$0xcc] %v335
        %s338 = scalar_lea.vmem [#allocation6], 2
        %v339 = vld [vmem:[%s338] ss:$8 sm:$0x3]
        %340 = vrot.lane.b32.xlu0 %v270, 32
        %v341 = vpop.permute.xlu0 %340
        %342 = vrot.lane.b32.xlu0 %v273, 32
        %v343 = vpop.permute.xlu0 %342
        %vm344 = vcmp.lt.s32.totalorder %v280, 32
        %v345 = vsel %vm344, %v341, %v343
        %v346 = vsel %vm344, %v343, %v341
        %v348 = vlaneseq
        %v349 = vshrl.u32 %v348, 7
        %v350 = vsub.s32 0, %v349
        %v351 = vrot.slane %v339, %v350
        %v352 = vlaneseq
        %v353 = vshrl.u32 %v352, 7
        %v354 = vsub.s32 1, %v353
        %v355 = vrot.slane %v339, %v354
        %v358 = vmul.f32 %v346, %v351
        %v359 = vmul.f32 %v345, %v355
        %v360 = vpack.c.bf16 %v358, %v358
        %v361 = vpack.c.bf16 %v359, %v359
        %v364 = vunpack.c.l.b16 %v360
        %v365 = vunpack.c.l.b16 %v361
        %v366 = vpack.c.b16 %v365, %v364
        %368 = vst [vmem:[#allocation2 + $0x8] sm:$0x33] %v366
        %s369 = scalar_lea.vmem [#allocation6], 3
        %v370 = vld [vmem:[%s369] ss:$8 sm:$0x3]
        %371 = vrot.lane.b32.xlu0 %v270, 31
        %v372 = vpop.permute.xlu0 %371
        %373 = vrot.lane.b32.xlu0 %v273, 31
        %v374 = vpop.permute.xlu0 %373
        %vm375 = vcmp.lt.s32.totalorder %v280, 31
        %v376 = vsel %vm375, %v372, %v374
        %v377 = vsel %vm375, %v374, %v372
        %v379 = vlaneseq
        %v380 = vshrl.u32 %v379, 7
        %v381 = vsub.s32 0, %v380
        %v382 = vrot.slane %v370, %v381
        %v383 = vlaneseq
        %v384 = vshrl.u32 %v383, 7
        %v385 = vsub.s32 1, %v384
        %v386 = vrot.slane %v370, %v385
        %v389 = vmul.f32 %v377, %v382
        %v390 = vmul.f32 %v376, %v386
        %v391 = vpack.c.bf16 %v389, %v389
        %v392 = vpack.c.bf16 %v390, %v390
        %v395 = vunpack.c.l.b16 %v391
        %v396 = vunpack.c.l.b16 %v392
        %v397 = vpack.c.b16 %v396, %v395
        %v398 = vrot.slane %v397, 6
        %400 = vst [vmem:[#allocation2 + $0x8] sm:$0xcc] %v398
        %s401 = scalar_lea.vmem [#allocation6], 4
        %v402 = vld [vmem:[%s401] ss:$8 sm:$0x3]
        %403 = vrot.lane.b32.xlu0 %v270, 30
        %v404 = vpop.permute.xlu0 %403
        %405 = vrot.lane.b32.xlu0 %v273, 30
        %v406 = vpop.permute.xlu0 %405
        %vm407 = vcmp.lt.s32.totalorder %v280, 30
        %v408 = vsel %vm407, %v404, %v406
        %v409 = vsel %vm407, %v406, %v404
        %v411 = vlaneseq
        %v412 = vshrl.u32 %v411, 7
        %v413 = vsub.s32 0, %v412
        %v414 = vrot.slane %v402, %v413
        %v415 = vlaneseq
        %v416 = vshrl.u32 %v415, 7
        %v417 = vsub.s32 1, %v416
        %v418 = vrot.slane %v402, %v417
        %v421 = vmul.f32 %v409, %v414
        %v422 = vmul.f32 %v408, %v418
        %v423 = vpack.c.bf16 %v421, %v421
        %v424 = vpack.c.bf16 %v422, %v422
        %v427 = vunpack.c.l.b16 %v423
        %v428 = vunpack.c.l.b16 %v424
        %v429 = vpack.c.b16 %v428, %v427
        %431 = vst [vmem:[#allocation2 + $0x10] sm:$0x33] %v429
        %s432 = scalar_lea.vmem [#allocation6], 5
        %v433 = vld [vmem:[%s432] ss:$8 sm:$0x3]
        %434 = vrot.lane.b32.xlu0 %v270, 18
        %v435 = vpop.permute.xlu0 %434
        %436 = vrot.lane.b32.xlu0 %v273, 18
        %v437 = vpop.permute.xlu0 %436
        %vm438 = vcmp.lt.s32.totalorder %v280, 18
        %v439 = vsel %vm438, %v435, %v437
        %v440 = vsel %vm438, %v437, %v435
        %v442 = vlaneseq
        %v443 = vshrl.u32 %v442, 7
        %v444 = vsub.s32 0, %v443
        %v445 = vrot.slane %v433, %v444
        %v446 = vlaneseq
        %v447 = vshrl.u32 %v446, 7
        %v448 = vsub.s32 1, %v447
        %v449 = vrot.slane %v433, %v448
        %v452 = vmul.f32 %v440, %v445
        %v453 = vmul.f32 %v439, %v449
        %v454 = vpack.c.bf16 %v452, %v452
        %v455 = vpack.c.bf16 %v453, %v453
        %v458 = vunpack.c.l.b16 %v454
        %v459 = vunpack.c.l.b16 %v455
        %v460 = vpack.c.b16 %v459, %v458
        %v461 = vrot.slane %v460, 6
        %463 = vst [vmem:[#allocation2 + $0x10] sm:$0xcc] %v461
        %s464 = scalar_lea.vmem [#allocation6], 6
        %v465 = vld [vmem:[%s464] ss:$8 sm:$0x3]
        %466 = vrot.lane.b32.xlu0 %v270, 17
        %v467 = vpop.permute.xlu0 %466
        %468 = vrot.lane.b32.xlu0 %v273, 17
        %v469 = vpop.permute.xlu0 %468
        %vm470 = vcmp.lt.s32.totalorder %v280, 17
        %v471 = vsel %vm470, %v467, %v469
        %v472 = vsel %vm470, %v469, %v467
        %v474 = vlaneseq
        %v475 = vshrl.u32 %v474, 7
        %v476 = vsub.s32 0, %v475
        %v477 = vrot.slane %v465, %v476
        %v478 = vlaneseq
        %v479 = vshrl.u32 %v478, 7
        %v480 = vsub.s32 1, %v479
        %v481 = vrot.slane %v465, %v480
        %v484 = vmul.f32 %v472, %v477
        %v485 = vmul.f32 %v471, %v481
        %v486 = vpack.c.bf16 %v484, %v484
        %v487 = vpack.c.bf16 %v485, %v485
        %v490 = vunpack.c.l.b16 %v486
        %v491 = vunpack.c.l.b16 %v487
        %v492 = vpack.c.b16 %v491, %v490
        %494 = vst [vmem:[#allocation2 + $0x18] sm:$0x33] %v492
        %s495 = scalar_lea.vmem [#allocation6], 7
        %v496 = vld [vmem:[%s495] ss:$8 sm:$0x3]
        %497 = vrot.lane.b32.xlu0 %v270, 16
        %v498 = vpop.permute.xlu0 %497
        %499 = vrot.lane.b32.xlu0 %v273, 16
        %v500 = vpop.permute.xlu0 %499
        %vm501 = vcmp.lt.s32.totalorder %v280, 16
        %v502 = vsel %vm501, %v498, %v500
        %v503 = vsel %vm501, %v500, %v498
        %v505 = vlaneseq
        %v506 = vshrl.u32 %v505, 7
        %v507 = vsub.s32 0, %v506
        %v508 = vrot.slane %v496, %v507
        %v509 = vlaneseq
        %v510 = vshrl.u32 %v509, 7
        %v511 = vsub.s32 1, %v510
        %v512 = vrot.slane %v496, %v511
        %v515 = vmul.f32 %v503, %v508
        %v516 = vmul.f32 %v502, %v512
        %v517 = vpack.c.bf16 %v515, %v515
        %v518 = vpack.c.bf16 %v516, %v516
        %v521 = vunpack.c.l.b16 %v517
        %v522 = vunpack.c.l.b16 %v518
        %v523 = vpack.c.b16 %v522, %v521
        %v524 = vrot.slane %v523, 6
        %526 = vst [vmem:[#allocation2 + $0x18] sm:$0xcc] %v524
        %s527 = scalar_lea.vmem [#allocation6], 16
        %v528 = vld [vmem:[%s527] ss:$8 sm:$0x3]
        %529 = vrot.lane.b32.xlu0 %v270, 15
        %v530 = vpop.permute.xlu0 %529
        %531 = vrot.lane.b32.xlu0 %v273, 15
        %v532 = vpop.permute.xlu0 %531
        %vm533 = vcmp.lt.s32.totalorder %v280, 15
        %v534 = vsel %vm533, %v530, %v532
        %v535 = vsel %vm533, %v532, %v530
        %v537 = vlaneseq
        %v538 = vshrl.u32 %v537, 7
        %v539 = vsub.s32 0, %v538
        %v540 = vrot.slane %v528, %v539
        %v541 = vlaneseq
        %v542 = vshrl.u32 %v541, 7
        %v543 = vsub.s32 1, %v542
        %v544 = vrot.slane %v528, %v543
        %v547 = vmul.f32 %v535, %v540
        %v548 = vmul.f32 %v534, %v544
        %v549 = vpack.c.bf16 %v547, %v547
        %v550 = vpack.c.bf16 %v548, %v548
        %v553 = vunpack.c.l.b16 %v549
        %v554 = vunpack.c.l.b16 %v550
        %v555 = vpack.c.b16 %v554, %v553
        %557 = vst [vmem:[#allocation2 + $0x20] sm:$0x33] %v555
        %s558 = scalar_lea.vmem [#allocation6], 17
        %v559 = vld [vmem:[%s558] ss:$8 sm:$0x3]
        %560 = vrot.lane.b32.xlu0 %v270, 14
        %v561 = vpop.permute.xlu0 %560
        %562 = vrot.lane.b32.xlu0 %v273, 14
        %v563 = vpop.permute.xlu0 %562
        %vm564 = vcmp.lt.s32.totalorder %v280, 14
        %v565 = vsel %vm564, %v561, %v563
        %v566 = vsel %vm564, %v563, %v561
        %v568 = vlaneseq
        %v569 = vshrl.u32 %v568, 7
        %v570 = vsub.s32 0, %v569
        %v571 = vrot.slane %v559, %v570
        %v572 = vlaneseq
        %v573 = vshrl.u32 %v572, 7
        %v574 = vsub.s32 1, %v573
        %v575 = vrot.slane %v559, %v574
        %v578 = vmul.f32 %v566, %v571
        %v579 = vmul.f32 %v565, %v575
        %v580 = vpack.c.bf16 %v578, %v578
        %v581 = vpack.c.bf16 %v579, %v579
        %v584 = vunpack.c.l.b16 %v580
        %v585 = vunpack.c.l.b16 %v581
        %v586 = vpack.c.b16 %v585, %v584
        %v587 = vrot.slane %v586, 6
        %589 = vst [vmem:[#allocation2 + $0x20] sm:$0xcc] %v587
        %s590 = scalar_lea.vmem [#allocation6], 18
        %v591 = vld [vmem:[%s590] ss:$8 sm:$0x3]
        %592 = vrot.lane.b32.xlu0 %v270, 2
        %v593 = vpop.permute.xlu0 %592
        %594 = vrot.lane.b32.xlu0 %v273, 2
        %v595 = vpop.permute.xlu0 %594
        %vm596 = vcmp.lt.s32.totalorder %v280, 2
        %v597 = vsel %vm596, %v593, %v595
        %v598 = vsel %vm596, %v595, %v593
        %v600 = vlaneseq
        %v601 = vshrl.u32 %v600, 7
        %v602 = vsub.s32 0, %v601
        %v603 = vrot.slane %v591, %v602
        %v604 = vlaneseq
        %v605 = vshrl.u32 %v604, 7
        %v606 = vsub.s32 1, %v605
        %v607 = vrot.slane %v591, %v606
        %v610 = vmul.f32 %v598, %v603
        %v611 = vmul.f32 %v597, %v607
        %v612 = vpack.c.bf16 %v610, %v610
        %v613 = vpack.c.bf16 %v611, %v611
        %v616 = vunpack.c.l.b16 %v612
        %v617 = vunpack.c.l.b16 %v613
        %v618 = vpack.c.b16 %v617, %v616
        %620 = vst [vmem:[#allocation2 + $0x28] sm:$0x33] %v618
        %s621 = scalar_lea.vmem [#allocation6], 19
        %v622 = vld [vmem:[%s621] ss:$8 sm:$0x3]
        %623 = vrot.lane.b32.xlu0 %v270, 1
        %v624 = vpop.permute.xlu0 %623
        %625 = vrot.lane.b32.xlu0 %v273, 1
        %v626 = vpop.permute.xlu0 %625
        %vm627 = vcmp.lt.s32.totalorder %v280, 1
        %v628 = vsel %vm627, %v624, %v626
        %v629 = vsel %vm627, %v626, %v624
        %v631 = vlaneseq
        %v632 = vshrl.u32 %v631, 7
        %v633 = vsub.s32 0, %v632
        %v634 = vrot.slane %v622, %v633
        %v635 = vlaneseq
        %v636 = vshrl.u32 %v635, 7
        %v637 = vsub.s32 1, %v636
        %v638 = vrot.slane %v622, %v637
        %v641 = vmul.f32 %v629, %v634
        %v642 = vmul.f32 %v628, %v638
        %v643 = vpack.c.bf16 %v641, %v641
        %v644 = vpack.c.bf16 %v642, %v642
        %v647 = vunpack.c.l.b16 %v643
        %v648 = vunpack.c.l.b16 %v644
        %v649 = vpack.c.b16 %v648, %v647
        %v650 = vrot.slane %v649, 6
        %652 = vst [vmem:[#allocation2 + $0x28] sm:$0xcc] %v650
        %s653 = scalar_lea.vmem [#allocation6], 20
        %v654 = vld [vmem:[%s653] ss:$8 sm:$0x3]
        %v656 = vlaneseq
        %v657 = vshrl.u32 %v656, 7
        %v658 = vsub.s32 0, %v657
        %v659 = vrot.slane %v654, %v658
        %v660 = vlaneseq
        %v661 = vshrl.u32 %v660, 7
        %v662 = vsub.s32 1, %v661
        %v663 = vrot.slane %v654, %v662
        %v664 = vcombine.low %v659, %v663
        %v666 = vmul.f32 %v270, %v664
        %v668 = vcombine.high %v666, %v666
        %v670 = vpack.c.bf16 %v666, %v666
        %v671 = vpack.c.bf16 %v668, %v668
        %v674 = vunpack.c.l.b16 %v670
        %v675 = vunpack.c.l.b16 %v671
        %v676 = vpack.c.b16 %v675, %v674
        %678 = vst [vmem:[#allocation2 + $0x30] sm:$0x33] %v676
        %s679 = scalar_lea.vmem [#allocation6], 21
        %v680 = vld [vmem:[%s679] ss:$8 sm:$0x3]
        %681 = vrot.lane.b32.xlu0 %v270, 127
        %v682 = vpop.permute.xlu0 %681
        %683 = vrot.lane.b32.xlu0 %v273, 127
        %v684 = vpop.permute.xlu0 %683
        %vm685 = vcmp.lt.s32.totalorder %v280, 127
        %v686 = vsel %vm685, %v682, %v684
        %v687 = vsel %vm685, %v684, %v682
        %v689 = vlaneseq
        %v690 = vshrl.u32 %v689, 7
        %v691 = vsub.s32 0, %v690
        %v692 = vrot.slane %v680, %v691
        %v693 = vlaneseq
        %v694 = vshrl.u32 %v693, 7
        %v695 = vsub.s32 1, %v694
        %v696 = vrot.slane %v680, %v695
        %v699 = vmul.f32 %v686, %v692
        %v700 = vmul.f32 %v687, %v696
        %v701 = vpack.c.bf16 %v699, %v699
        %v702 = vpack.c.bf16 %v700, %v700
        %v705 = vunpack.c.l.b16 %v701
        %v706 = vunpack.c.l.b16 %v702
        %v707 = vpack.c.b16 %v706, %v705
        %v708 = vrot.slane %v707, 6
        %710 = vst [vmem:[#allocation2 + $0x30] sm:$0xcc] %v708
        %s711 = scalar_lea.vmem [#allocation6], 22
        %v712 = vld [vmem:[%s711] ss:$8 sm:$0x3]
        %713 = vrot.lane.b32.xlu0 %v270, 126
        %v714 = vpop.permute.xlu0 %713
        %715 = vrot.lane.b32.xlu0 %v273, 126
        %v716 = vpop.permute.xlu0 %715
        %vm717 = vcmp.lt.s32.totalorder %v280, 126
        %v718 = vsel %vm717, %v714, %v716
        %v719 = vsel %vm717, %v716, %v714
        %v721 = vlaneseq
        %v722 = vshrl.u32 %v721, 7
        %v723 = vsub.s32 0, %v722
        %v724 = vrot.slane %v712, %v723
        %v725 = vlaneseq
        %v726 = vshrl.u32 %v725, 7
        %v727 = vsub.s32 1, %v726
        %v728 = vrot.slane %v712, %v727
        %v731 = vmul.f32 %v718, %v724
        %v732 = vmul.f32 %v719, %v728
        %v733 = vpack.c.bf16 %v731, %v731
        %v734 = vpack.c.bf16 %v732, %v732
        %v737 = vunpack.c.l.b16 %v733
        %v738 = vunpack.c.l.b16 %v734
        %v739 = vpack.c.b16 %v738, %v737
        %741 = vst [vmem:[#allocation2 + $0x38] sm:$0x33] %v739
        %s742 = scalar_lea.vmem [#allocation6], 23
        %v743 = vld [vmem:[%s742] ss:$8 sm:$0x3]
        %744 = vrot.lane.b32.xlu0 %v270, 114
        %v745 = vpop.permute.xlu0 %744
        %746 = vrot.lane.b32.xlu0 %v273, 114
        %v747 = vpop.permute.xlu0 %746
        %vm748 = vcmp.lt.s32.totalorder %v280, 114
        %v749 = vsel %vm748, %v745, %v747
        %v750 = vsel %vm748, %v747, %v745
        %v752 = vlaneseq
        %v753 = vshrl.u32 %v752, 7
        %v754 = vsub.s32 0, %v753
        %v755 = vrot.slane %v743, %v754
        %v756 = vlaneseq
        %v757 = vshrl.u32 %v756, 7
        %v758 = vsub.s32 1, %v757
        %v759 = vrot.slane %v743, %v758
        %v762 = vmul.f32 %v749, %v755
        %v763 = vmul.f32 %v750, %v759
        %v764 = vpack.c.bf16 %v762, %v762
        %v765 = vpack.c.bf16 %v763, %v763
        %v768 = vunpack.c.l.b16 %v764
        %v769 = vunpack.c.l.b16 %v765
        %v770 = vpack.c.b16 %v769, %v768
        %v771 = vrot.slane %v770, 6
        %773 = vst [vmem:[#allocation2 + $0x38] sm:$0xcc] %v771
        %s774 = scalar_lea.vmem [#allocation6], 32
        %v775 = vld [vmem:[%s774] ss:$8 sm:$0x3]
        %776 = vrot.lane.b32.xlu0 %v270, 113
        %v777 = vpop.permute.xlu0 %776
        %778 = vrot.lane.b32.xlu0 %v273, 113
        %v779 = vpop.permute.xlu0 %778
        %vm780 = vcmp.lt.s32.totalorder %v280, 113
        %v781 = vsel %vm780, %v777, %v779
        %v782 = vsel %vm780, %v779, %v777
        %v784 = vlaneseq
        %v785 = vshrl.u32 %v784, 7
        %v786 = vsub.s32 0, %v785
        %v787 = vrot.slane %v775, %v786
        %v788 = vlaneseq
        %v789 = vshrl.u32 %v788, 7
        %v790 = vsub.s32 1, %v789
        %v791 = vrot.slane %v775, %v790
        %v794 = vmul.f32 %v781, %v787
        %v795 = vmul.f32 %v782, %v791
        %v796 = vpack.c.bf16 %v794, %v794
        %v797 = vpack.c.bf16 %v795, %v795
        %v800 = vunpack.c.l.b16 %v796
        %v801 = vunpack.c.l.b16 %v797
        %v802 = vpack.c.b16 %v801, %v800
        %804 = vst [vmem:[#allocation2 + $0x40] sm:$0x33] %v802
        %s805 = scalar_lea.vmem [#allocation6], 33
        %v806 = vld [vmem:[%s805] ss:$8 sm:$0x3]
        %807 = vrot.lane.b32.xlu0 %v270, 112
        %v808 = vpop.permute.xlu0 %807
        %809 = vrot.lane.b32.xlu0 %v273, 112
        %v810 = vpop.permute.xlu0 %809
        %vm811 = vcmp.lt.s32.totalorder %v280, 112
        %v812 = vsel %vm811, %v808, %v810
        %v813 = vsel %vm811, %v810, %v808
        %v815 = vlaneseq
        %v816 = vshrl.u32 %v815, 7
        %v817 = vsub.s32 0, %v816
        %v818 = vrot.slane %v806, %v817
        %v819 = vlaneseq
        %v820 = vshrl.u32 %v819, 7
        %v821 = vsub.s32 1, %v820
        %v822 = vrot.slane %v806, %v821
        %v825 = vmul.f32 %v812, %v818
        %v826 = vmul.f32 %v813, %v822
        %v827 = vpack.c.bf16 %v825, %v825
        %v828 = vpack.c.bf16 %v826, %v826
        %v831 = vunpack.c.l.b16 %v827
        %v832 = vunpack.c.l.b16 %v828
        %v833 = vpack.c.b16 %v832, %v831
        %v834 = vrot.slane %v833, 6
        %836 = vst [vmem:[#allocation2 + $0x40] sm:$0xcc] %v834
        %s837 = scalar_lea.vmem [#allocation6], 34
        %v838 = vld [vmem:[%s837] ss:$8 sm:$0x3]
        %839 = vrot.lane.b32.xlu0 %v270, 111
        %v840 = vpop.permute.xlu0 %839
        %841 = vrot.lane.b32.xlu0 %v273, 111
        %v842 = vpop.permute.xlu0 %841
        %vm843 = vcmp.lt.s32.totalorder %v280, 111
        %v844 = vsel %vm843, %v840, %v842
        %v845 = vsel %vm843, %v842, %v840
        %v847 = vlaneseq
        %v848 = vshrl.u32 %v847, 7
        %v849 = vsub.s32 0, %v848
        %v850 = vrot.slane %v838, %v849
        %v851 = vlaneseq
        %v852 = vshrl.u32 %v851, 7
        %v853 = vsub.s32 1, %v852
        %v854 = vrot.slane %v838, %v853
        %v857 = vmul.f32 %v844, %v850
        %v858 = vmul.f32 %v845, %v854
        %v859 = vpack.c.bf16 %v857, %v857
        %v860 = vpack.c.bf16 %v858, %v858
        %v863 = vunpack.c.l.b16 %v859
        %v864 = vunpack.c.l.b16 %v860
        %v865 = vpack.c.b16 %v864, %v863
        %867 = vst [vmem:[#allocation2 + $0x48] sm:$0x33] %v865
        %s868 = scalar_lea.vmem [#allocation6], 35
        %v869 = vld [vmem:[%s868] ss:$8 sm:$0x3]
        %870 = vrot.lane.b32.xlu0 %v270, 110
        %v871 = vpop.permute.xlu0 %870
        %872 = vrot.lane.b32.xlu0 %v273, 110
        %v873 = vpop.permute.xlu0 %872
        %vm874 = vcmp.lt.s32.totalorder %v280, 110
        %v875 = vsel %vm874, %v871, %v873
        %v876 = vsel %vm874, %v873, %v871
        %v878 = vlaneseq
        %v879 = vshrl.u32 %v878, 7
        %v880 = vsub.s32 0, %v879
        %v881 = vrot.slane %v869, %v880
        %v882 = vlaneseq
        %v883 = vshrl.u32 %v882, 7
        %v884 = vsub.s32 1, %v883
        %v885 = vrot.slane %v869, %v884
        %v888 = vmul.f32 %v875, %v881
        %v889 = vmul.f32 %v876, %v885
        %v890 = vpack.c.bf16 %v888, %v888
        %v891 = vpack.c.bf16 %v889, %v889
        %v894 = vunpack.c.l.b16 %v890
        %v895 = vunpack.c.l.b16 %v891
        %v896 = vpack.c.b16 %v895, %v894
        %v897 = vrot.slane %v896, 6
        %899 = vst [vmem:[#allocation2 + $0x48] sm:$0xcc] %v897
        %s900 = scalar_lea.vmem [#allocation6], 36
        %v901 = vld [vmem:[%s900] ss:$8 sm:$0x3]
        %902 = vrot.lane.b32.xlu0 %v270, 98
        %v903 = vpop.permute.xlu0 %902
        %904 = vrot.lane.b32.xlu0 %v273, 98
        %v905 = vpop.permute.xlu0 %904
        %vm906 = vcmp.lt.s32.totalorder %v280, 98
        %v907 = vsel %vm906, %v903, %v905
        %v908 = vsel %vm906, %v905, %v903
        %v910 = vlaneseq
        %v911 = vshrl.u32 %v910, 7
        %v912 = vsub.s32 0, %v911
        %v913 = vrot.slane %v901, %v912
        %v914 = vlaneseq
        %v915 = vshrl.u32 %v914, 7
        %v916 = vsub.s32 1, %v915
        %v917 = vrot.slane %v901, %v916
        %v920 = vmul.f32 %v907, %v913
        %v921 = vmul.f32 %v908, %v917
        %v922 = vpack.c.bf16 %v920, %v920
        %v923 = vpack.c.bf16 %v921, %v921
        %v926 = vunpack.c.l.b16 %v922
        %v927 = vunpack.c.l.b16 %v923
        %v928 = vpack.c.b16 %v927, %v926
        %930 = vst [vmem:[#allocation2 + $0x50] sm:$0x33] %v928
        %s931 = scalar_lea.vmem [#allocation6], 37
        %v932 = vld [vmem:[%s931] ss:$8 sm:$0x3]
        %933 = vrot.lane.b32.xlu0 %v270, 97
        %v934 = vpop.permute.xlu0 %933
        %935 = vrot.lane.b32.xlu0 %v273, 97
        %v936 = vpop.permute.xlu0 %935
        %vm937 = vcmp.lt.s32.totalorder %v280, 97
        %v938 = vsel %vm937, %v934, %v936
        %v939 = vsel %vm937, %v936, %v934
        %v941 = vlaneseq
        %v942 = vshrl.u32 %v941, 7
        %v943 = vsub.s32 0, %v942
        %v944 = vrot.slane %v932, %v943
        %v945 = vlaneseq
        %v946 = vshrl.u32 %v945, 7
        %v947 = vsub.s32 1, %v946
        %v948 = vrot.slane %v932, %v947
        %v951 = vmul.f32 %v938, %v944
        %v952 = vmul.f32 %v939, %v948
        %v953 = vpack.c.bf16 %v951, %v951
        %v954 = vpack.c.bf16 %v952, %v952
        %v957 = vunpack.c.l.b16 %v953
        %v958 = vunpack.c.l.b16 %v954
        %v959 = vpack.c.b16 %v958, %v957
        %v960 = vrot.slane %v959, 6
        %962 = vst [vmem:[#allocation2 + $0x50] sm:$0xcc] %v960
        %s963 = scalar_lea.vmem [#allocation6], 38
        %v964 = vld [vmem:[%s963] ss:$8 sm:$0x3]
        %965 = vrot.lane.b32.xlu0 %v270, 96
        %v966 = vpop.permute.xlu0 %965
        %967 = vrot.lane.b32.xlu0 %v273, 96
        %v968 = vpop.permute.xlu0 %967
        %vm969 = vcmp.lt.s32.totalorder %v280, 96
        %v970 = vsel %vm969, %v966, %v968
        %v971 = vsel %vm969, %v968, %v966
        %v973 = vlaneseq
        %v974 = vshrl.u32 %v973, 7
        %v975 = vsub.s32 0, %v974
        %v976 = vrot.slane %v964, %v975
        %v977 = vlaneseq
        %v978 = vshrl.u32 %v977, 7
        %v979 = vsub.s32 1, %v978
        %v980 = vrot.slane %v964, %v979
        %v983 = vmul.f32 %v970, %v976
        %v984 = vmul.f32 %v971, %v980
        %v985 = vpack.c.bf16 %v983, %v983
        %v986 = vpack.c.bf16 %v984, %v984
        %v989 = vunpack.c.l.b16 %v985
        %v990 = vunpack.c.l.b16 %v986
        %v991 = vpack.c.b16 %v990, %v989
        %993 = vst [vmem:[#allocation2 + $0x58] sm:$0x33] %v991
        %s994 = scalar_lea.vmem [#allocation6], 39
        %v995 = vld [vmem:[%s994] ss:$8 sm:$0x3]
        %996 = vrot.lane.b32.xlu0 %v270, 95
        %v997 = vpop.permute.xlu0 %996
        %998 = vrot.lane.b32.xlu0 %v273, 95
        %v999 = vpop.permute.xlu0 %998
        %vm1000 = vcmp.lt.s32.totalorder %v280, 95
        %v1001 = vsel %vm1000, %v997, %v999
        %v1002 = vsel %vm1000, %v999, %v997
        %v1004 = vlaneseq
        %v1005 = vshrl.u32 %v1004, 7
        %v1006 = vsub.s32 0, %v1005
        %v1007 = vrot.slane %v995, %v1006
        %v1008 = vlaneseq
        %v1009 = vshrl.u32 %v1008, 7
        %v1010 = vsub.s32 1, %v1009
        %v1011 = vrot.slane %v995, %v1010
        %v1014 = vmul.f32 %v1001, %v1007
        %v1015 = vmul.f32 %v1002, %v1011
        %v1016 = vpack.c.bf16 %v1014, %v1014
        %v1017 = vpack.c.bf16 %v1015, %v1015
        %v1020 = vunpack.c.l.b16 %v1016
        %v1021 = vunpack.c.l.b16 %v1017
        %v1022 = vpack.c.b16 %v1021, %v1020
        %v1023 = vrot.slane %v1022, 6
        %1025 = vst [vmem:[#allocation2 + $0x58] sm:$0xcc] %v1023
        %s1026 = scalar_lea.vmem [#allocation6], 48
        %v1027 = vld [vmem:[%s1026] ss:$8 sm:$0x3]
        %1028 = vrot.lane.b32.xlu0 %v270, 94
        %v1029 = vpop.permute.xlu0 %1028
        %1030 = vrot.lane.b32.xlu0 %v273, 94
        %v1031 = vpop.permute.xlu0 %1030
        %vm1032 = vcmp.lt.s32.totalorder %v280, 94
        %v1033 = vsel %vm1032, %v1029, %v1031
        %v1034 = vsel %vm1032, %v1031, %v1029
        %v1036 = vlaneseq
        %v1037 = vshrl.u32 %v1036, 7
        %v1038 = vsub.s32 0, %v1037
        %v1039 = vrot.slane %v1027, %v1038
        %v1040 = vlaneseq
        %v1041 = vshrl.u32 %v1040, 7
        %v1042 = vsub.s32 1, %v1041
        %v1043 = vrot.slane %v1027, %v1042
        %v1046 = vmul.f32 %v1033, %v1039
        %v1047 = vmul.f32 %v1034, %v1043
        %v1048 = vpack.c.bf16 %v1046, %v1046
        %v1049 = vpack.c.bf16 %v1047, %v1047
        %v1052 = vunpack.c.l.b16 %v1048
        %v1053 = vunpack.c.l.b16 %v1049
        %v1054 = vpack.c.b16 %v1053, %v1052
        %1056 = vst [vmem:[#allocation2 + $0x60] sm:$0x33] %v1054
        %v1057 = vld [vmem:[%s2] sm:$0x3]
        %v1058 = vld [vmem:[#allocation2] sm:$0xff]
        %v1059 = vld [vmem:[#allocation2 + $0x8] sm:$0xff]
        %v1060 = vld [vmem:[#allocation2 + $0x10] sm:$0xff]
        %v1061 = vld [vmem:[#allocation2 + $0x18] sm:$0xff]
        %v1062 = vld [vmem:[#allocation2 + $0x20] sm:$0xff]
        %v1063 = vld [vmem:[#allocation2 + $0x28] sm:$0xff]
        %v1064 = vld [vmem:[#allocation2 + $0x30] sm:$0xff]
        %v1065 = vld [vmem:[#allocation2 + $0x38] sm:$0xff]
        %v1066 = vld [vmem:[#allocation2 + $0x40] sm:$0xff]
        %v1067 = vld [vmem:[#allocation2 + $0x48] sm:$0xff]
        %v1068 = vld [vmem:[#allocation2 + $0x50] sm:$0xff]
        %v1069 = vld [vmem:[#allocation2 + $0x58] sm:$0xff]
        %v1070 = vld [vmem:[#allocation2 + $0x60] sm:$0x33]
        %v1084 = vunpack.c.l.b16 %v1058
        %v1085 = vunpack.c.h.b16 %v1058
        %v1086 = vunpack.c.l.b16 %v1059
        %v1087 = vunpack.c.h.b16 %v1059
        %v1088 = vunpack.c.l.b16 %v1060
        %v1089 = vunpack.c.h.b16 %v1060
        %v1090 = vunpack.c.l.b16 %v1061
        %v1091 = vunpack.c.h.b16 %v1061
        %v1092 = vunpack.c.l.b16 %v1062
        %v1093 = vunpack.c.h.b16 %v1062
        %v1094 = vunpack.c.l.b16 %v1063
        %v1095 = vunpack.c.h.b16 %v1063
        %v1096 = vunpack.c.l.b16 %v1064
        %v1097 = vunpack.c.h.b16 %v1064
        %v1098 = vunpack.c.l.b16 %v1065
        %v1099 = vunpack.c.h.b16 %v1065
        %v1100 = vunpack.c.l.b16 %v1066
        %v1101 = vunpack.c.h.b16 %v1066
        %v1102 = vunpack.c.l.b16 %v1067
        %v1103 = vunpack.c.h.b16 %v1067
        %v1104 = vunpack.c.l.b16 %v1068
        %v1105 = vunpack.c.h.b16 %v1068
        %v1106 = vunpack.c.l.b16 %v1069
        %v1107 = vunpack.c.h.b16 %v1069
        %v1108 = vunpack.c.l.b16 %v1070
        %v1109 = vunpack.c.h.b16 %v1070
        %v1110 = vpack.c.b16 %v1086, %v1084
        %v1111 = vpack.c.b16 %v1087, %v1085
        %v1112 = vpack.c.b16 %v1090, %v1088
        %v1113 = vpack.c.b16 %v1091, %v1089
        %v1114 = vpack.c.b16 %v1094, %v1092
        %v1115 = vpack.c.b16 %v1095, %v1093
        %v1116 = vpack.c.b16 %v1098, %v1096
        %v1117 = vpack.c.b16 %v1099, %v1097
        %v1118 = vpack.c.b16 %v1102, %v1100
        %v1119 = vpack.c.b16 %v1103, %v1101
        %v1120 = vpack.c.b16 %v1106, %v1104
        %v1121 = vpack.c.b16 %v1107, %v1105
        %v1122 = vpack.c.b16 %v1108, %v1108
        %v1123 = vpack.c.b16 %v1109, %v1109
        %vm1136 = vcmask 818176
        %v1138 = vsel %vm1136, %v1057, 0
        %vm1140 = vcmask 1041408
        %v1142 = vsel %vm1140, %v1122, 0
        %v1145 = vsel %vm1140, %v1123, 0
        %1147 = vmatprep.subr.bf16.mxu0 0
        %1148 = vmatpush1.bf16.msra.mxu0 0
        %1149 = vmatprep.subr.bf16.mxu0 %v1145
        %1150 = vmatpush1.bf16.msra.mxu0 %v1142
        %1151 = vmatprep.subr.bf16.mxu0 %v1121
        %1152 = vmatpush1.bf16.msra.mxu0 %v1120
        %1153 = vmatprep.subr.bf16.mxu0 %v1119
        %1154 = vmatpush1.bf16.msra.mxu0 %v1118
        %1155 = vmatprep.subr.bf16.mxu0 %v1117
        %1156 = vmatpush1.bf16.msra.mxu0 %v1116
        %1157 = vmatprep.subr.bf16.mxu0 %v1115
        %1158 = vmatpush1.bf16.msra.mxu0 %v1114
        %1159 = vmatprep.subr.bf16.mxu0 %v1113
        %1160 = vmatpush1.bf16.msra.mxu0 %v1112
        %1161 = vmatprep.subr.bf16.mxu0 %v1111
        %1162 = vmatpush1.bf16.msra.mxu0 %v1110
        %1163 = vmatprep.subr.bf16.mxu0 0
        %1164 = vmatpush2.bf16.msra.mxu0 0
        %1165 = vmatprep.subr.bf16.mxu0 0
        %1166 = vmatpush2.bf16.msra.mxu0 0
        %1167 = vmatprep.subr.bf16.mxu0 0
        %1168 = vmatpush2.bf16.msra.mxu0 0
        %1169 = vmatprep.subr.bf16.mxu0 0
        %1170 = vmatpush2.bf16.msra.mxu0 0
        %1171 = vmatprep.subr.bf16.mxu0 0
        %1172 = vmatpush2.bf16.msra.mxu0 0
        %1173 = vmatprep.subr.bf16.mxu0 0
        %1174 = vmatpush2.bf16.msra.mxu0 0
        %1175 = vmatprep.subr.bf16.mxu0 0
        %1176 = vmatpush2.bf16.msra.mxu0 0
        %1177 = vmatprep.subr.bf16.mxu0 0
        %1178 = vmatpush2.bf16.msra.mxu0 0
        %1179 = vmatprep.mubr.bf16.mxu0 0
        %1180 = vmatmul.mubr.bf16.gmra.mxu0 %v1138
        %v1181 = vpop.f32.mrf.mxu0
        %v1182 = vadd.f32 0.0, %v1181
        %v1183 = vpop.f32.mrf.mxu0
        %v1184 = vadd.f32 0.0, %v1183
        %v1185 = vpop.f32.mrf.mxu0
        %v1186 = vpop.f32.mrf.mxu0
        %1187 = vdwg.mxu0
        %1189 = vset.pattern.permute.xlu0 0
        %1190 = vperm.xlu0 %1189, %v269
        %v1191 = vpop.permute.xlu0 %1190
        %v1193 = vmul.f32 %v1182, %v1191
        %v1194 = vmul.f32 %v1184, %v1191
        %1195 = vset.pattern.permute.xlu0 1
        %1196 = vperm.xlu0 %1195, %v269
        %v1197 = vpop.permute.xlu0 %1196
        %v1199 = vadd.f32 %v1193, %v1197
        %v1200 = vadd.f32 %v1194, %v1197
        %v1201 = vmax.f32 %v1199, 0.0
        %v1202 = vmax.f32 %v1200, 0.0
        %v1203 = vld [vmem:[#allocation6] ss:$8 sm:$0x3]
        %1204 = vrot.lane.b32.xlu0 %v1201, 34
        %v1205 = vpop.permute.xlu0 %1204
        %1206 = vrot.lane.b32.xlu0 %v1202, 34
        %v1207 = vpop.permute.xlu0 %1206
        %v1208 = vsel %vm281, %v1205, %v1207
        %v1209 = vsel %vm281, %v1207, %v1205
        %v1211 = vlaneseq
        %v1212 = vshrl.u32 %v1211, 7
        %v1213 = vsub.s32 0, %v1212
        %v1214 = vrot.slane %v1203, %v1213
        %v1215 = vlaneseq
        %v1216 = vshrl.u32 %v1215, 7
        %v1217 = vsub.s32 1, %v1216
        %v1218 = vrot.slane %v1203, %v1217
        %v1221 = vmul.f32 %v1209, %v1214
        %v1222 = vmul.f32 %v1208, %v1218
        %v1223 = vpack.c.bf16 %v1221, %v1221
        %v1224 = vpack.c.bf16 %v1222, %v1222
        %v1227 = vunpack.c.l.b16 %v1223
        %v1228 = vunpack.c.l.b16 %v1224
        %v1229 = vpack.c.b16 %v1228, %v1227
        %1231 = vst [vmem:[#allocation2] sm:$0x33] %v1229
        %v1232 = vld [vmem:[%s306] ss:$8 sm:$0x3]
        %1233 = vrot.lane.b32.xlu0 %v1201, 33
        %v1234 = vpop.permute.xlu0 %1233
        %1235 = vrot.lane.b32.xlu0 %v1202, 33
        %v1236 = vpop.permute.xlu0 %1235
        %v1237 = vsel %vm312, %v1234, %v1236
        %v1238 = vsel %vm312, %v1236, %v1234
        %v1240 = vlaneseq
        %v1241 = vshrl.u32 %v1240, 7
        %v1242 = vsub.s32 0, %v1241
        %v1243 = vrot.slane %v1232, %v1242
        %v1244 = vlaneseq
        %v1245 = vshrl.u32 %v1244, 7
        %v1246 = vsub.s32 1, %v1245
        %v1247 = vrot.slane %v1232, %v1246
        %v1250 = vmul.f32 %v1238, %v1243
        %v1251 = vmul.f32 %v1237, %v1247
        %v1252 = vpack.c.bf16 %v1250, %v1250
        %v1253 = vpack.c.bf16 %v1251, %v1251
        %v1256 = vunpack.c.l.b16 %v1252
        %v1257 = vunpack.c.l.b16 %v1253
        %v1258 = vpack.c.b16 %v1257, %v1256
        %v1259 = vrot.slane %v1258, 6
        %1261 = vst [vmem:[#allocation2] sm:$0xcc] %v1259
        %v1262 = vld [vmem:[%s338] ss:$8 sm:$0x3]
        %1263 = vrot.lane.b32.xlu0 %v1201, 32
        %v1264 = vpop.permute.xlu0 %1263
        %1265 = vrot.lane.b32.xlu0 %v1202, 32
        %v1266 = vpop.permute.xlu0 %1265
        %v1267 = vsel %vm344, %v1264, %v1266
        %v1268 = vsel %vm344, %v1266, %v1264
        %v1270 = vlaneseq
        %v1271 = vshrl.u32 %v1270, 7
        %v1272 = vsub.s32 0, %v1271
        %v1273 = vrot.slane %v1262, %v1272
        %v1274 = vlaneseq
        %v1275 = vshrl.u32 %v1274, 7
        %v1276 = vsub.s32 1, %v1275
        %v1277 = vrot.slane %v1262, %v1276
        %v1280 = vmul.f32 %v1268, %v1273
        %v1281 = vmul.f32 %v1267, %v1277
        %v1282 = vpack.c.bf16 %v1280, %v1280
        %v1283 = vpack.c.bf16 %v1281, %v1281
        %v1286 = vunpack.c.l.b16 %v1282
        %v1287 = vunpack.c.l.b16 %v1283
        %v1288 = vpack.c.b16 %v1287, %v1286
        %1290 = vst [vmem:[#allocation2 + $0x8] sm:$0x33] %v1288
        %v1291 = vld [vmem:[%s369] ss:$8 sm:$0x3]
        %1292 = vrot.lane.b32.xlu0 %v1201, 31
        %v1293 = vpop.permute.xlu0 %1292
        %1294 = vrot.lane.b32.xlu0 %v1202, 31
        %v1295 = vpop.permute.xlu0 %1294
        %v1296 = vsel %vm375, %v1293, %v1295
        %v1297 = vsel %vm375, %v1295, %v1293
        %v1299 = vlaneseq
        %v1300 = vshrl.u32 %v1299, 7
        %v1301 = vsub.s32 0, %v1300
        %v1302 = vrot.slane %v1291, %v1301
        %v1303 = vlaneseq
        %v1304 = vshrl.u32 %v1303, 7
        %v1305 = vsub.s32 1, %v1304
        %v1306 = vrot.slane %v1291, %v1305
        %v1309 = vmul.f32 %v1297, %v1302
        %v1310 = vmul.f32 %v1296, %v1306
        %v1311 = vpack.c.bf16 %v1309, %v1309
        %v1312 = vpack.c.bf16 %v1310, %v1310
        %v1315 = vunpack.c.l.b16 %v1311
        %v1316 = vunpack.c.l.b16 %v1312
        %v1317 = vpack.c.b16 %v1316, %v1315
        %v1318 = vrot.slane %v1317, 6
        %1320 = vst [vmem:[#allocation2 + $0x8] sm:$0xcc] %v1318
        %v1321 = vld [vmem:[%s401] ss:$8 sm:$0x3]
        %1322 = vrot.lane.b32.xlu0 %v1201, 30
        %v1323 = vpop.permute.xlu0 %1322
        %1324 = vrot.lane.b32.xlu0 %v1202, 30
        %v1325 = vpop.permute.xlu0 %1324
        %v1326 = vsel %vm407, %v1323, %v1325
        %v1327 = vsel %vm407, %v1325, %v1323
        %v1329 = vlaneseq
        %v1330 = vshrl.u32 %v1329, 7
        %v1331 = vsub.s32 0, %v1330
        %v1332 = vrot.slane %v1321, %v1331
        %v1333 = vlaneseq
        %v1334 = vshrl.u32 %v1333, 7
        %v1335 = vsub.s32 1, %v1334
        %v1336 = vrot.slane %v1321, %v1335
        %v1339 = vmul.f32 %v1327, %v1332
        %v1340 = vmul.f32 %v1326, %v1336
        %v1341 = vpack.c.bf16 %v1339, %v1339
        %v1342 = vpack.c.bf16 %v1340, %v1340
        %v1345 = vunpack.c.l.b16 %v1341
        %v1346 = vunpack.c.l.b16 %v1342
        %v1347 = vpack.c.b16 %v1346, %v1345
        %1349 = vst [vmem:[#allocation2 + $0x10] sm:$0x33] %v1347
        %v1350 = vld [vmem:[%s432] ss:$8 sm:$0x3]
        %1351 = vrot.lane.b32.xlu0 %v1201, 18
        %v1352 = vpop.permute.xlu0 %1351
        %1353 = vrot.lane.b32.xlu0 %v1202, 18
        %v1354 = vpop.permute.xlu0 %1353
        %v1355 = vsel %vm438, %v1352, %v1354
        %v1356 = vsel %vm438, %v1354, %v1352
        %v1358 = vlaneseq
        %v1359 = vshrl.u32 %v1358, 7
        %v1360 = vsub.s32 0, %v1359
        %v1361 = vrot.slane %v1350, %v1360
        %v1362 = vlaneseq
        %v1363 = vshrl.u32 %v1362, 7
        %v1364 = vsub.s32 1, %v1363
        %v1365 = vrot.slane %v1350, %v1364
        %v1368 = vmul.f32 %v1356, %v1361
        %v1369 = vmul.f32 %v1355, %v1365
        %v1370 = vpack.c.bf16 %v1368, %v1368
        %v1371 = vpack.c.bf16 %v1369, %v1369
        %v1374 = vunpack.c.l.b16 %v1370
        %v1375 = vunpack.c.l.b16 %v1371
        %v1376 = vpack.c.b16 %v1375, %v1374
        %v1377 = vrot.slane %v1376, 6
        %1379 = vst [vmem:[#allocation2 + $0x10] sm:$0xcc] %v1377
        %v1380 = vld [vmem:[%s464] ss:$8 sm:$0x3]
        %1381 = vrot.lane.b32.xlu0 %v1201, 17
        %v1382 = vpop.permute.xlu0 %1381
        %1383 = vrot.lane.b32.xlu0 %v1202, 17
        %v1384 = vpop.permute.xlu0 %1383
        %v1385 = vsel %vm470, %v1382, %v1384
        %v1386 = vsel %vm470, %v1384, %v1382
        %v1388 = vlaneseq
        %v1389 = vshrl.u32 %v1388, 7
        %v1390 = vsub.s32 0, %v1389
        %v1391 = vrot.slane %v1380, %v1390
        %v1392 = vlaneseq
        %v1393 = vshrl.u32 %v1392, 7
        %v1394 = vsub.s32 1, %v1393
        %v1395 = vrot.slane %v1380, %v1394
        %v1398 = vmul.f32 %v1386, %v1391
        %v1399 = vmul.f32 %v1385, %v1395
        %v1400 = vpack.c.bf16 %v1398, %v1398
        %v1401 = vpack.c.bf16 %v1399, %v1399
        %v1404 = vunpack.c.l.b16 %v1400
        %v1405 = vunpack.c.l.b16 %v1401
        %v1406 = vpack.c.b16 %v1405, %v1404
        %1408 = vst [vmem:[#allocation2 + $0x18] sm:$0x33] %v1406
        %v1409 = vld [vmem:[%s495] ss:$8 sm:$0x3]
        %1410 = vrot.lane.b32.xlu0 %v1201, 16
        %v1411 = vpop.permute.xlu0 %1410
        %1412 = vrot.lane.b32.xlu0 %v1202, 16
        %v1413 = vpop.permute.xlu0 %1412
        %v1414 = vsel %vm501, %v1411, %v1413
        %v1415 = vsel %vm501, %v1413, %v1411
        %v1417 = vlaneseq
        %v1418 = vshrl.u32 %v1417, 7
        %v1419 = vsub.s32 0, %v1418
        %v1420 = vrot.slane %v1409, %v1419
        %v1421 = vlaneseq
        %v1422 = vshrl.u32 %v1421, 7
        %v1423 = vsub.s32 1, %v1422
        %v1424 = vrot.slane %v1409, %v1423
        %v1427 = vmul.f32 %v1415, %v1420
        %v1428 = vmul.f32 %v1414, %v1424
        %v1429 = vpack.c.bf16 %v1427, %v1427
        %v1430 = vpack.c.bf16 %v1428, %v1428
        %v1433 = vunpack.c.l.b16 %v1429
        %v1434 = vunpack.c.l.b16 %v1430
        %v1435 = vpack.c.b16 %v1434, %v1433
        %v1436 = vrot.slane %v1435, 6
        %1438 = vst [vmem:[#allocation2 + $0x18] sm:$0xcc] %v1436
        %v1439 = vld [vmem:[%s527] ss:$8 sm:$0x3]
        %1440 = vrot.lane.b32.xlu0 %v1201, 15
        %v1441 = vpop.permute.xlu0 %1440
        %1442 = vrot.lane.b32.xlu0 %v1202, 15
        %v1443 = vpop.permute.xlu0 %1442
        %v1444 = vsel %vm533, %v1441, %v1443
        %v1445 = vsel %vm533, %v1443, %v1441
        %v1447 = vlaneseq
        %v1448 = vshrl.u32 %v1447, 7
        %v1449 = vsub.s32 0, %v1448
        %v1450 = vrot.slane %v1439, %v1449
        %v1451 = vlaneseq
        %v1452 = vshrl.u32 %v1451, 7
        %v1453 = vsub.s32 1, %v1452
        %v1454 = vrot.slane %v1439, %v1453
        %v1457 = vmul.f32 %v1445, %v1450
        %v1458 = vmul.f32 %v1444, %v1454
        %v1459 = vpack.c.bf16 %v1457, %v1457
        %v1460 = vpack.c.bf16 %v1458, %v1458
        %v1463 = vunpack.c.l.b16 %v1459
        %v1464 = vunpack.c.l.b16 %v1460
        %v1465 = vpack.c.b16 %v1464, %v1463
        %1467 = vst [vmem:[#allocation2 + $0x20] sm:$0x33] %v1465
        %v1468 = vld [vmem:[%s558] ss:$8 sm:$0x3]
        %1469 = vrot.lane.b32.xlu0 %v1201, 14
        %v1470 = vpop.permute.xlu0 %1469
        %1471 = vrot.lane.b32.xlu0 %v1202, 14
        %v1472 = vpop.permute.xlu0 %1471
        %v1473 = vsel %vm564, %v1470, %v1472
        %v1474 = vsel %vm564, %v1472, %v1470
        %v1476 = vlaneseq
        %v1477 = vshrl.u32 %v1476, 7
        %v1478 = vsub.s32 0, %v1477
        %v1479 = vrot.slane %v1468, %v1478
        %v1480 = vlaneseq
        %v1481 = vshrl.u32 %v1480, 7
        %v1482 = vsub.s32 1, %v1481
        %v1483 = vrot.slane %v1468, %v1482
        %v1486 = vmul.f32 %v1474, %v1479
        %v1487 = vmul.f32 %v1473, %v1483
        %v1488 = vpack.c.bf16 %v1486, %v1486
        %v1489 = vpack.c.bf16 %v1487, %v1487
        %v1492 = vunpack.c.l.b16 %v1488
        %v1493 = vunpack.c.l.b16 %v1489
        %v1494 = vpack.c.b16 %v1493, %v1492
        %v1495 = vrot.slane %v1494, 6
        %1497 = vst [vmem:[#allocation2 + $0x20] sm:$0xcc] %v1495
        %v1498 = vld [vmem:[%s590] ss:$8 sm:$0x3]
        %1499 = vrot.lane.b32.xlu0 %v1201, 2
        %v1500 = vpop.permute.xlu0 %1499
        %1501 = vrot.lane.b32.xlu0 %v1202, 2
        %v1502 = vpop.permute.xlu0 %1501
        %v1503 = vsel %vm596, %v1500, %v1502
        %v1504 = vsel %vm596, %v1502, %v1500
        %v1506 = vlaneseq
        %v1507 = vshrl.u32 %v1506, 7
        %v1508 = vsub.s32 0, %v1507
        %v1509 = vrot.slane %v1498, %v1508
        %v1510 = vlaneseq
        %v1511 = vshrl.u32 %v1510, 7
        %v1512 = vsub.s32 1, %v1511
        %v1513 = vrot.slane %v1498, %v1512
        %v1516 = vmul.f32 %v1504, %v1509
        %v1517 = vmul.f32 %v1503, %v1513
        %v1518 = vpack.c.bf16 %v1516, %v1516
        %v1519 = vpack.c.bf16 %v1517, %v1517
        %v1522 = vunpack.c.l.b16 %v1518
        %v1523 = vunpack.c.l.b16 %v1519
        %v1524 = vpack.c.b16 %v1523, %v1522
        %1526 = vst [vmem:[#allocation2 + $0x28] sm:$0x33] %v1524
        %v1527 = vld [vmem:[%s621] ss:$8 sm:$0x3]
        %1528 = vrot.lane.b32.xlu0 %v1201, 1
        %v1529 = vpop.permute.xlu0 %1528
        %1530 = vrot.lane.b32.xlu0 %v1202, 1
        %v1531 = vpop.permute.xlu0 %1530
        %v1532 = vsel %vm627, %v1529, %v1531
        %v1533 = vsel %vm627, %v1531, %v1529
        %v1535 = vlaneseq
        %v1536 = vshrl.u32 %v1535, 7
        %v1537 = vsub.s32 0, %v1536
        %v1538 = vrot.slane %v1527, %v1537
        %v1539 = vlaneseq
        %v1540 = vshrl.u32 %v1539, 7
        %v1541 = vsub.s32 1, %v1540
        %v1542 = vrot.slane %v1527, %v1541
        %v1545 = vmul.f32 %v1533, %v1538
        %v1546 = vmul.f32 %v1532, %v1542
        %v1547 = vpack.c.bf16 %v1545, %v1545
        %v1548 = vpack.c.bf16 %v1546, %v1546
        %v1551 = vunpack.c.l.b16 %v1547
        %v1552 = vunpack.c.l.b16 %v1548
        %v1553 = vpack.c.b16 %v1552, %v1551
        %v1554 = vrot.slane %v1553, 6
        %1556 = vst [vmem:[#allocation2 + $0x28] sm:$0xcc] %v1554
        %v1557 = vld [vmem:[%s653] ss:$8 sm:$0x3]
        %v1559 = vlaneseq
        %v1560 = vshrl.u32 %v1559, 7
        %v1561 = vsub.s32 0, %v1560
        %v1562 = vrot.slane %v1557, %v1561
        %v1563 = vlaneseq
        %v1564 = vshrl.u32 %v1563, 7
        %v1565 = vsub.s32 1, %v1564
        %v1566 = vrot.slane %v1557, %v1565
        %v1569 = vmul.f32 %v1201, %v1562
        %v1570 = vmul.f32 %v1202, %v1566
        %v1571 = vpack.c.bf16 %v1569, %v1569
        %v1572 = vpack.c.bf16 %v1570, %v1570
        %v1575 = vunpack.c.l.b16 %v1571
        %v1576 = vunpack.c.l.b16 %v1572
        %v1577 = vpack.c.b16 %v1576, %v1575
        %1579 = vst [vmem:[#allocation2 + $0x30] sm:$0x33] %v1577
        %v1580 = vld [vmem:[%s679] ss:$8 sm:$0x3]
        %1581 = vrot.lane.b32.xlu0 %v1201, 127
        %v1582 = vpop.permute.xlu0 %1581
        %1583 = vrot.lane.b32.xlu0 %v1202, 127
        %v1584 = vpop.permute.xlu0 %1583
        %v1585 = vsel %vm685, %v1582, %v1584
        %v1586 = vsel %vm685, %v1584, %v1582
        %v1588 = vlaneseq
        %v1589 = vshrl.u32 %v1588, 7
        %v1590 = vsub.s32 0, %v1589
        %v1591 = vrot.slane %v1580, %v1590
        %v1592 = vlaneseq
        %v1593 = vshrl.u32 %v1592, 7
        %v1594 = vsub.s32 1, %v1593
        %v1595 = vrot.slane %v1580, %v1594
        %v1598 = vmul.f32 %v1585, %v1591
        %v1599 = vmul.f32 %v1586, %v1595
        %v1600 = vpack.c.bf16 %v1598, %v1598
        %v1601 = vpack.c.bf16 %v1599, %v1599
        %v1604 = vunpack.c.l.b16 %v1600
        %v1605 = vunpack.c.l.b16 %v1601
        %v1606 = vpack.c.b16 %v1605, %v1604
        %v1607 = vrot.slane %v1606, 6
        %1609 = vst [vmem:[#allocation2 + $0x30] sm:$0xcc] %v1607
        %v1610 = vld [vmem:[%s711] ss:$8 sm:$0x3]
        %1611 = vrot.lane.b32.xlu0 %v1201, 126
        %v1612 = vpop.permute.xlu0 %1611
        %1613 = vrot.lane.b32.xlu0 %v1202, 126
        %v1614 = vpop.permute.xlu0 %1613
        %v1615 = vsel %vm717, %v1612, %v1614
        %v1616 = vsel %vm717, %v1614, %v1612
        %v1618 = vlaneseq
        %v1619 = vshrl.u32 %v1618, 7
        %v1620 = vsub.s32 0, %v1619
        %v1621 = vrot.slane %v1610, %v1620
        %v1622 = vlaneseq
        %v1623 = vshrl.u32 %v1622, 7
        %v1624 = vsub.s32 1, %v1623
        %v1625 = vrot.slane %v1610, %v1624
        %v1628 = vmul.f32 %v1615, %v1621
        %v1629 = vmul.f32 %v1616, %v1625
        %v1630 = vpack.c.bf16 %v1628, %v1628
        %v1631 = vpack.c.bf16 %v1629, %v1629
        %v1634 = vunpack.c.l.b16 %v1630
        %v1635 = vunpack.c.l.b16 %v1631
        %v1636 = vpack.c.b16 %v1635, %v1634
        %1638 = vst [vmem:[#allocation2 + $0x38] sm:$0x33] %v1636
        %v1639 = vld [vmem:[%s742] ss:$8 sm:$0x3]
        %1640 = vrot.lane.b32.xlu0 %v1201, 114
        %v1641 = vpop.permute.xlu0 %1640
        %1642 = vrot.lane.b32.xlu0 %v1202, 114
        %v1643 = vpop.permute.xlu0 %1642
        %v1644 = vsel %vm748, %v1641, %v1643
        %v1645 = vsel %vm748, %v1643, %v1641
        %v1647 = vlaneseq
        %v1648 = vshrl.u32 %v1647, 7
        %v1649 = vsub.s32 0, %v1648
        %v1650 = vrot.slane %v1639, %v1649
        %v1651 = vlaneseq
        %v1652 = vshrl.u32 %v1651, 7
        %v1653 = vsub.s32 1, %v1652
        %v1654 = vrot.slane %v1639, %v1653
        %v1657 = vmul.f32 %v1644, %v1650
        %v1658 = vmul.f32 %v1645, %v1654
        %v1659 = vpack.c.bf16 %v1657, %v1657
        %v1660 = vpack.c.bf16 %v1658, %v1658
        %v1663 = vunpack.c.l.b16 %v1659
        %v1664 = vunpack.c.l.b16 %v1660
        %v1665 = vpack.c.b16 %v1664, %v1663
        %v1666 = vrot.slane %v1665, 6
        %1668 = vst [vmem:[#allocation2 + $0x38] sm:$0xcc] %v1666
        %v1669 = vld [vmem:[%s774] ss:$8 sm:$0x3]
        %1670 = vrot.lane.b32.xlu0 %v1201, 113
        %v1671 = vpop.permute.xlu0 %1670
        %1672 = vrot.lane.b32.xlu0 %v1202, 113
        %v1673 = vpop.permute.xlu0 %1672
        %v1674 = vsel %vm780, %v1671, %v1673
        %v1675 = vsel %vm780, %v1673, %v1671
        %v1677 = vlaneseq
        %v1678 = vshrl.u32 %v1677, 7
        %v1679 = vsub.s32 0, %v1678
        %v1680 = vrot.slane %v1669, %v1679
        %v1681 = vlaneseq
        %v1682 = vshrl.u32 %v1681, 7
        %v1683 = vsub.s32 1, %v1682
        %v1684 = vrot.slane %v1669, %v1683
        %v1687 = vmul.f32 %v1674, %v1680
        %v1688 = vmul.f32 %v1675, %v1684
        %v1689 = vpack.c.bf16 %v1687, %v1687
        %v1690 = vpack.c.bf16 %v1688, %v1688
        %v1693 = vunpack.c.l.b16 %v1689
        %v1694 = vunpack.c.l.b16 %v1690
        %v1695 = vpack.c.b16 %v1694, %v1693
        %1697 = vst [vmem:[#allocation2 + $0x40] sm:$0x33] %v1695
        %v1698 = vld [vmem:[%s805] ss:$8 sm:$0x3]
        %1699 = vrot.lane.b32.xlu0 %v1201, 112
        %v1700 = vpop.permute.xlu0 %1699
        %1701 = vrot.lane.b32.xlu0 %v1202, 112
        %v1702 = vpop.permute.xlu0 %1701
        %v1703 = vsel %vm811, %v1700, %v1702
        %v1704 = vsel %vm811, %v1702, %v1700
        %v1706 = vlaneseq
        %v1707 = vshrl.u32 %v1706, 7
        %v1708 = vsub.s32 0, %v1707
        %v1709 = vrot.slane %v1698, %v1708
        %v1710 = vlaneseq
        %v1711 = vshrl.u32 %v1710, 7
        %v1712 = vsub.s32 1, %v1711
        %v1713 = vrot.slane %v1698, %v1712
        %v1716 = vmul.f32 %v1703, %v1709
        %v1717 = vmul.f32 %v1704, %v1713
        %v1718 = vpack.c.bf16 %v1716, %v1716
        %v1719 = vpack.c.bf16 %v1717, %v1717
        %v1722 = vunpack.c.l.b16 %v1718
        %v1723 = vunpack.c.l.b16 %v1719
        %v1724 = vpack.c.b16 %v1723, %v1722
        %v1725 = vrot.slane %v1724, 6
        %1727 = vst [vmem:[#allocation2 + $0x40] sm:$0xcc] %v1725
        %v1728 = vld [vmem:[%s837] ss:$8 sm:$0x3]
        %1729 = vrot.lane.b32.xlu0 %v1201, 111
        %v1730 = vpop.permute.xlu0 %1729
        %1731 = vrot.lane.b32.xlu0 %v1202, 111
        %v1732 = vpop.permute.xlu0 %1731
        %v1733 = vsel %vm843, %v1730, %v1732
        %v1734 = vsel %vm843, %v1732, %v1730
        %v1736 = vlaneseq
        %v1737 = vshrl.u32 %v1736, 7
        %v1738 = vsub.s32 0, %v1737
        %v1739 = vrot.slane %v1728, %v1738
        %v1740 = vlaneseq
        %v1741 = vshrl.u32 %v1740, 7
        %v1742 = vsub.s32 1, %v1741
        %v1743 = vrot.slane %v1728, %v1742
        %v1746 = vmul.f32 %v1733, %v1739
        %v1747 = vmul.f32 %v1734, %v1743
        %v1748 = vpack.c.bf16 %v1746, %v1746
        %v1749 = vpack.c.bf16 %v1747, %v1747
        %v1752 = vunpack.c.l.b16 %v1748
        %v1753 = vunpack.c.l.b16 %v1749
        %v1754 = vpack.c.b16 %v1753, %v1752
        %1756 = vst [vmem:[#allocation2 + $0x48] sm:$0x33] %v1754
        %v1757 = vld [vmem:[%s868] ss:$8 sm:$0x3]
        %1758 = vrot.lane.b32.xlu0 %v1201, 110
        %v1759 = vpop.permute.xlu0 %1758
        %1760 = vrot.lane.b32.xlu0 %v1202, 110
        %v1761 = vpop.permute.xlu0 %1760
        %v1762 = vsel %vm874, %v1759, %v1761
        %v1763 = vsel %vm874, %v1761, %v1759
        %v1765 = vlaneseq
        %v1766 = vshrl.u32 %v1765, 7
        %v1767 = vsub.s32 0, %v1766
        %v1768 = vrot.slane %v1757, %v1767
        %v1769 = vlaneseq
        %v1770 = vshrl.u32 %v1769, 7
        %v1771 = vsub.s32 1, %v1770
        %v1772 = vrot.slane %v1757, %v1771
        %v1775 = vmul.f32 %v1762, %v1768
        %v1776 = vmul.f32 %v1763, %v1772
        %v1777 = vpack.c.bf16 %v1775, %v1775
        %v1778 = vpack.c.bf16 %v1776, %v1776
        %v1781 = vunpack.c.l.b16 %v1777
        %v1782 = vunpack.c.l.b16 %v1778
        %v1783 = vpack.c.b16 %v1782, %v1781
        %v1784 = vrot.slane %v1783, 6
        %1786 = vst [vmem:[#allocation2 + $0x48] sm:$0xcc] %v1784
        %v1787 = vld [vmem:[%s900] ss:$8 sm:$0x3]
        %1788 = vrot.lane.b32.xlu0 %v1201, 98
        %v1789 = vpop.permute.xlu0 %1788
        %1790 = vrot.lane.b32.xlu0 %v1202, 98
        %v1791 = vpop.permute.xlu0 %1790
        %v1792 = vsel %vm906, %v1789, %v1791
        %v1793 = vsel %vm906, %v1791, %v1789
        %v1795 = vlaneseq
        %v1796 = vshrl.u32 %v1795, 7
        %v1797 = vsub.s32 0, %v1796
        %v1798 = vrot.slane %v1787, %v1797
        %v1799 = vlaneseq
        %v1800 = vshrl.u32 %v1799, 7
        %v1801 = vsub.s32 1, %v1800
        %v1802 = vrot.slane %v1787, %v1801
        %v1805 = vmul.f32 %v1792, %v1798
        %v1806 = vmul.f32 %v1793, %v1802
        %v1807 = vpack.c.bf16 %v1805, %v1805
        %v1808 = vpack.c.bf16 %v1806, %v1806
        %v1811 = vunpack.c.l.b16 %v1807
        %v1812 = vunpack.c.l.b16 %v1808
        %v1813 = vpack.c.b16 %v1812, %v1811
        %1815 = vst [vmem:[#allocation2 + $0x50] sm:$0x33] %v1813
        %v1816 = vld [vmem:[%s931] ss:$8 sm:$0x3]
        %1817 = vrot.lane.b32.xlu0 %v1201, 97
        %v1818 = vpop.permute.xlu0 %1817
        %1819 = vrot.lane.b32.xlu0 %v1202, 97
        %v1820 = vpop.permute.xlu0 %1819
        %v1821 = vsel %vm937, %v1818, %v1820
        %v1822 = vsel %vm937, %v1820, %v1818
        %v1824 = vlaneseq
        %v1825 = vshrl.u32 %v1824, 7
        %v1826 = vsub.s32 0, %v1825
        %v1827 = vrot.slane %v1816, %v1826
        %v1828 = vlaneseq
        %v1829 = vshrl.u32 %v1828, 7
        %v1830 = vsub.s32 1, %v1829
        %v1831 = vrot.slane %v1816, %v1830
        %v1834 = vmul.f32 %v1821, %v1827
        %v1835 = vmul.f32 %v1822, %v1831
        %v1836 = vpack.c.bf16 %v1834, %v1834
        %v1837 = vpack.c.bf16 %v1835, %v1835
        %v1840 = vunpack.c.l.b16 %v1836
        %v1841 = vunpack.c.l.b16 %v1837
        %v1842 = vpack.c.b16 %v1841, %v1840
        %v1843 = vrot.slane %v1842, 6
        %1845 = vst [vmem:[#allocation2 + $0x50] sm:$0xcc] %v1843
        %v1846 = vld [vmem:[%s963] ss:$8 sm:$0x3]
        %1847 = vrot.lane.b32.xlu0 %v1201, 96
        %v1848 = vpop.permute.xlu0 %1847
        %1849 = vrot.lane.b32.xlu0 %v1202, 96
        %v1850 = vpop.permute.xlu0 %1849
        %v1851 = vsel %vm969, %v1848, %v1850
        %v1852 = vsel %vm969, %v1850, %v1848
        %v1854 = vlaneseq
        %v1855 = vshrl.u32 %v1854, 7
        %v1856 = vsub.s32 0, %v1855
        %v1857 = vrot.slane %v1846, %v1856
        %v1858 = vlaneseq
        %v1859 = vshrl.u32 %v1858, 7
        %v1860 = vsub.s32 1, %v1859
        %v1861 = vrot.slane %v1846, %v1860
        %v1864 = vmul.f32 %v1851, %v1857
        %v1865 = vmul.f32 %v1852, %v1861
        %v1866 = vpack.c.bf16 %v1864, %v1864
        %v1867 = vpack.c.bf16 %v1865, %v1865
        %v1870 = vunpack.c.l.b16 %v1866
        %v1871 = vunpack.c.l.b16 %v1867
        %v1872 = vpack.c.b16 %v1871, %v1870
        %1874 = vst [vmem:[#allocation2 + $0x58] sm:$0x33] %v1872
        %v1875 = vld [vmem:[%s994] ss:$8 sm:$0x3]
        %1876 = vrot.lane.b32.xlu0 %v1201, 95
        %v1877 = vpop.permute.xlu0 %1876
        %1878 = vrot.lane.b32.xlu0 %v1202, 95
        %v1879 = vpop.permute.xlu0 %1878
        %v1880 = vsel %vm1000, %v1877, %v1879
        %v1881 = vsel %vm1000, %v1879, %v1877
        %v1883 = vlaneseq
        %v1884 = vshrl.u32 %v1883, 7
        %v1885 = vsub.s32 0, %v1884
        %v1886 = vrot.slane %v1875, %v1885
        %v1887 = vlaneseq
        %v1888 = vshrl.u32 %v1887, 7
        %v1889 = vsub.s32 1, %v1888
        %v1890 = vrot.slane %v1875, %v1889
        %v1893 = vmul.f32 %v1880, %v1886
        %v1894 = vmul.f32 %v1881, %v1890
        %v1895 = vpack.c.bf16 %v1893, %v1893
        %v1896 = vpack.c.bf16 %v1894, %v1894
        %v1899 = vunpack.c.l.b16 %v1895
        %v1900 = vunpack.c.l.b16 %v1896
        %v1901 = vpack.c.b16 %v1900, %v1899
        %v1902 = vrot.slane %v1901, 6
        %1904 = vst [vmem:[#allocation2 + $0x58] sm:$0xcc] %v1902
        %v1905 = vld [vmem:[%s1026] ss:$8 sm:$0x3]
        %1906 = vrot.lane.b32.xlu0 %v1201, 94
        %v1907 = vpop.permute.xlu0 %1906
        %1908 = vrot.lane.b32.xlu0 %v1202, 94
        %v1909 = vpop.permute.xlu0 %1908
        %v1910 = vsel %vm1032, %v1907, %v1909
        %v1911 = vsel %vm1032, %v1909, %v1907
        %v1913 = vlaneseq
        %v1914 = vshrl.u32 %v1913, 7
        %v1915 = vsub.s32 0, %v1914
        %v1916 = vrot.slane %v1905, %v1915
        %v1917 = vlaneseq
        %v1918 = vshrl.u32 %v1917, 7
        %v1919 = vsub.s32 1, %v1918
        %v1920 = vrot.slane %v1905, %v1919
        %v1923 = vmul.f32 %v1910, %v1916
        %v1924 = vmul.f32 %v1911, %v1920
        %v1925 = vpack.c.bf16 %v1923, %v1923
        %v1926 = vpack.c.bf16 %v1924, %v1924
        %v1929 = vunpack.c.l.b16 %v1925
        %v1930 = vunpack.c.l.b16 %v1926
        %v1931 = vpack.c.b16 %v1930, %v1929
        %1933 = vst [vmem:[#allocation2 + $0x60] sm:$0x33] %v1931
        %v1934 = vld [vmem:[#allocation8] sm:$0x3]
        %v1935 = vld [vmem:[#allocation2] sm:$0xff]
        %v1936 = vld [vmem:[#allocation2 + $0x8] sm:$0xff]
        %v1937 = vld [vmem:[#allocation2 + $0x10] sm:$0xff]
        %v1938 = vld [vmem:[#allocation2 + $0x18] sm:$0xff]
        %v1939 = vld [vmem:[#allocation2 + $0x20] sm:$0xff]
        %v1940 = vld [vmem:[#allocation2 + $0x28] sm:$0xff]
        %v1941 = vld [vmem:[#allocation2 + $0x30] sm:$0xff]
        %v1942 = vld [vmem:[#allocation2 + $0x38] sm:$0xff]
        %v1943 = vld [vmem:[#allocation2 + $0x40] sm:$0xff]
        %v1944 = vld [vmem:[#allocation2 + $0x48] sm:$0xff]
        %v1945 = vld [vmem:[#allocation2 + $0x50] sm:$0xff]
        %v1946 = vld [vmem:[#allocation2 + $0x58] sm:$0xff]
        %v1947 = vld [vmem:[#allocation2 + $0x60] sm:$0x33]
        %v1961 = vunpack.c.l.b16 %v1935
        %v1962 = vunpack.c.h.b16 %v1935
        %v1963 = vunpack.c.l.b16 %v1936
        %v1964 = vunpack.c.h.b16 %v1936
        %v1965 = vunpack.c.l.b16 %v1937
        %v1966 = vunpack.c.h.b16 %v1937
        %v1967 = vunpack.c.l.b16 %v1938
        %v1968 = vunpack.c.h.b16 %v1938
        %v1969 = vunpack.c.l.b16 %v1939
        %v1970 = vunpack.c.h.b16 %v1939
        %v1971 = vunpack.c.l.b16 %v1940
        %v1972 = vunpack.c.h.b16 %v1940
        %v1973 = vunpack.c.l.b16 %v1941
        %v1974 = vunpack.c.h.b16 %v1941
        %v1975 = vunpack.c.l.b16 %v1942
        %v1976 = vunpack.c.h.b16 %v1942
        %v1977 = vunpack.c.l.b16 %v1943
        %v1978 = vunpack.c.h.b16 %v1943
        %v1979 = vunpack.c.l.b16 %v1944
        %v1980 = vunpack.c.h.b16 %v1944
        %v1981 = vunpack.c.l.b16 %v1945
        %v1982 = vunpack.c.h.b16 %v1945
        %v1983 = vunpack.c.l.b16 %v1946
        %v1984 = vunpack.c.h.b16 %v1946
        %v1985 = vunpack.c.l.b16 %v1947
        %v1986 = vunpack.c.h.b16 %v1947
        %v1987 = vpack.c.b16 %v1963, %v1961
        %v1988 = vpack.c.b16 %v1964, %v1962
        %v1989 = vpack.c.b16 %v1967, %v1965
        %v1990 = vpack.c.b16 %v1968, %v1966
        %v1991 = vpack.c.b16 %v1971, %v1969
        %v1992 = vpack.c.b16 %v1972, %v1970
        %v1993 = vpack.c.b16 %v1975, %v1973
        %v1994 = vpack.c.b16 %v1976, %v1974
        %v1995 = vpack.c.b16 %v1979, %v1977
        %v1996 = vpack.c.b16 %v1980, %v1978
        %v1997 = vpack.c.b16 %v1983, %v1981
        %v1998 = vpack.c.b16 %v1984, %v1982
        %v1999 = vpack.c.b16 %v1985, %v1985
        %v2000 = vpack.c.b16 %v1986, %v1986
        %v2014 = vsel %vm1136, %v1934, 0
        %v2017 = vsel %vm1140, %v1999, 0
        %v2020 = vsel %vm1140, %v2000, 0
        %2022 = vmatprep.subr.bf16.mxu0 0
        %2023 = vmatpush1.bf16.msra.mxu0 0
        %2024 = vmatprep.subr.bf16.mxu0 %v2020
        %2025 = vmatpush1.bf16.msra.mxu0 %v2017
        %2026 = vmatprep.subr.bf16.mxu0 %v1998
        %2027 = vmatpush1.bf16.msra.mxu0 %v1997
        %2028 = vmatprep.subr.bf16.mxu0 %v1996
        %2029 = vmatpush1.bf16.msra.mxu0 %v1995
        %2030 = vmatprep.subr.bf16.mxu0 %v1994
        %2031 = vmatpush1.bf16.msra.mxu0 %v1993
        %2032 = vmatprep.subr.bf16.mxu0 %v1992
        %2033 = vmatpush1.bf16.msra.mxu0 %v1991
        %2034 = vmatprep.subr.bf16.mxu0 %v1990
        %2035 = vmatpush1.bf16.msra.mxu0 %v1989
        %2036 = vmatprep.subr.bf16.mxu0 %v1988
        %2037 = vmatpush1.bf16.msra.mxu0 %v1987
        %2038 = vmatprep.subr.bf16.mxu0 0
        %2039 = vmatpush2.bf16.msra.mxu0 0
        %2040 = vmatprep.subr.bf16.mxu0 0
        %2041 = vmatpush2.bf16.msra.mxu0 0
        %2042 = vmatprep.subr.bf16.mxu0 0
        %2043 = vmatpush2.bf16.msra.mxu0 0
        %2044 = vmatprep.subr.bf16.mxu0 0
        %2045 = vmatpush2.bf16.msra.mxu0 0
        %2046 = vmatprep.subr.bf16.mxu0 0
        %2047 = vmatpush2.bf16.msra.mxu0 0
        %2048 = vmatprep.subr.bf16.mxu0 0
        %2049 = vmatpush2.bf16.msra.mxu0 0
        %2050 = vmatprep.subr.bf16.mxu0 0
        %2051 = vmatpush2.bf16.msra.mxu0 0
        %2052 = vmatprep.subr.bf16.mxu0 0
        %2053 = vmatpush2.bf16.msra.mxu0 0
        %2054 = vmatprep.mubr.bf16.mxu0 0
        %2055 = vmatmul.mubr.bf16.gmra.mxu0 %v2014
        %v2056 = vpop.f32.mrf.mxu0
        %v2057 = vadd.f32 0.0, %v2056
        %v2058 = vpop.f32.mrf.mxu0
        %v2059 = vadd.f32 0.0, %v2058
        %v2060 = vpop.f32.mrf.mxu0
        %v2061 = vpop.f32.mrf.mxu0
        %2062 = vdwg.mxu0
        %2063 = vset.pattern.permute.xlu0 2
        %2064 = vperm.xlu0 %2063, %v269
        %v2065 = vpop.permute.xlu0 %2064
        %v2067 = vmul.f32 %v2057, %v2065
        %v2068 = vmul.f32 %v2059, %v2065
        %2069 = vset.pattern.permute.xlu0 3
        %2070 = vperm.xlu0 %2069, %v269
        %v2071 = vpop.permute.xlu0 %2070
        %v2073 = vadd.f32 %v2067, %v2071
        %v2074 = vadd.f32 %v2068, %v2071
        %v2075 = vadd.f32 %v2073, %v270
        %v2076 = vadd.f32 %v2074, %v273
        %v2077 = vmax.f32 %v2075, 0.0
        %v2078 = vmax.f32 %v2076, 0.0
        %v2081 = vcombine.low %v2077, %v2078
        %2083 = vst [vmem:[%s267] sm:$0xff] %v2081
        %s2084 = sand.u32 %s141, 1
        %s2085 = scalar_lea.sflag [#allocation5], %s2084
        %s2086 = sand.u32 %s141, 1
        %s2087 = smul.addr %s2086, 8
        %s2088 = scalar_lea.vmem [#allocation9], %s2087
        // Predicated region
        $region53: #{tpu_custom_call.1} parent=39 // pred_check
          %p2089 = pneg %p151
        $region54: #{tpu_custom_call.1} parent=39 // pred_check_branch
          %2091 = sbr.rel (%p2089) target = $region56
        $region55: #{tpu_custom_call.1} parent=39 // pred_region
          %s2093 = ssub.s32 128, 128
          %2094 = vsyncadd %s2085, %s2093
          %s2095 = smul.addr %s23, 2
          %s2096 = smul.addr %s2095, 64
          %s2097 = scalar_lea.hbm %s5, %s2096
          %s2099 = sshll.u32 %s2088, 4
          %s2100 = int_to_ptr.vmem [resolvable:$true] %s2099
          %2102 = dma.vmem_to_hbm [thread:$0]  %s2100, 128, %s2097, %s2085
        $region56: #{tpu_custom_call.1} parent=39 // pred_fallthru
          _
      $region40: #{tpu_custom_call.1} parent=5 // pred_fallthru
        _
      %p2103 = scmp.le.s32.totalorder 2, %s18
      // Predicated region
      $region57: #{tpu_custom_call.1} parent=5 // pred_check
        %p2104 = pneg %p2103
      $region58: #{tpu_custom_call.1} parent=5 // pred_check_branch
        %2106 = sbr.rel (%p2104) target = $region60
      $region59: #{tpu_custom_call.1} parent=5 // pred_region
        %s2107 = ssub.s32 %s18, 2
        // Predicated region
        $region61: #{tpu_custom_call.1} parent=59 // pred_check
          %p2108 = pneg %p157
        $region62: #{tpu_custom_call.1} parent=59 // pred_check_branch
          %2110 = sbr.rel (%p2108) target = $region64
        $region63: #{tpu_custom_call.1} parent=59 // pred_region
          %s2111 = sand.u32 %s142, 1
          %s2112 = scalar_lea.sflag [#allocation5], %s2111
          %s2113 = sand.u32 %s142, 1
          %s2114 = smul.addr %s2113, 8
          %s2115 = scalar_lea.vmem [#allocation9], %s2114
          %2116 = dma.done %s2112, 128
        $region64: #{tpu_custom_call.1} parent=59 // pred_fallthru
          _
      $region60: #{tpu_custom_call.1} parent=5 // pred_fallthru
        _
    $region6: #{tpu_custom_call.1} parent=1 // loop_footer
      %s22 = sadd.s32 1, %s18
    $region7: #{tpu_custom_call.1} parent=1 // loop_footer_branch
      %17 = sbr.rel target = $region3
    $region8: #{tpu_custom_call.1} parent=1 // loop_exit
      _
    %2117 = vsyncpa [#allocation4], 1
    %s2118 = scalar_lea.sflag [#allocation4], 1
    %2119 = vsyncpa %s2118, 1
    %2120 = vsyncpa [#allocation7], 1
    %2121 = vsyncpa [#allocation5], 1
    %s2122 = scalar_lea.sflag [#allocation5], 1
    %2123 = vsyncpa %s2122, 1

</llo_original>
